<compile_context>
chip_gen: v5e
topology: v5e:2x2
jax: 0.10.0
libtpu: 0.0.40
codegen_flags: <defaults>
</compile_context>

<pallas_src>
import functools

import jax
import jax.numpy as jnp
from jax.experimental import pallas as pl
from jax.experimental.pallas import tpu as pltpu


def rescbam_kernel(x_ref, w1_ref, b1_ref, s1_ref, t1_ref,
                   w2_ref, b2_ref, s2_ref, t2_ref,
                   caw1_ref, caw2_ref, o_ref, *, nb, seq_len):
    """One batch-chunk (nb batch elements flattened along rows) per grid step.

    x_ref    : (nb*L, Cp)        input rows (NLC flattened, channels lane-padded)
    wX_ref   : (K, Cp, Cp)       conv weights, tap-major, (Cin, Cout) per tap
    bX_ref   : (1, Cp)           conv bias
    sX/tX    : (1, Cp)           folded eval-mode BatchNorm scale / shift
    caw1/2   : (Cp, Crp)/(Crp, Cp)  channel-attention MLP weights
    o_ref    : (nb*L, Cp)        output rows
    """
    M, Cp = x_ref.shape
    K = w1_ref.shape[0]
    pad = (K - 1) // 2
    L = seq_len

    x = x_ref[...].astype(jnp.float32)                         # (M, Cp)

    # Per-shift validity masks (built once, reused by both convs): after rolling
    # the tap-k result by s = pad - k rows, the |s| rows at each batch-element
    # boundary carry wrapped / cross-batch data and must be zeroed.
    rows = jax.lax.broadcasted_iota(jnp.int32, (M, 1), 0)
    tap_masks = {}
    for k in range(K):
        s = pad - k
        if s == 0 or s in tap_masks:
            continue
        invalid = jnp.zeros((M, 1), dtype=jnp.bool_)
        for b in range(nb):                                    # static, nb is small
            if s > 0:
                lo, hi = b * L, b * L + s
            else:
                lo, hi = (b + 1) * L + s, (b + 1) * L
            invalid = invalid | ((rows >= lo) & (rows < hi))
        tap_masks[s] = jnp.logical_not(invalid).astype(jnp.float32)   # (M, 1)

    def conv1d_same(inp, w_ref, b_ref):
        # out[l] = sum_k inp[l + k - pad] @ w[k]  ==  sum_k roll(inp @ w[k], pad - k)
        acc = jnp.zeros((M, Cp), jnp.float32)
        for k in range(K):                                     # static tap loop
            y = jnp.dot(inp, w_ref[k], preferred_element_type=jnp.float32)
            s = pad - k
            if s != 0:
                y = pltpu.roll(y, shift=s % M, axis=0)         # jnp.roll semantics
                y = y * tap_masks[s]                           # zero boundary rows
            acc = acc + y
        return acc + b_ref[...]

    # conv1 -> bn1 -> relu
    h = conv1d_same(x, w1_ref, b1_ref)
    h = jnp.maximum(h * s1_ref[...] + t1_ref[...], 0.0)

    # conv2 -> bn2
    h = conv1d_same(h, w2_ref, b2_ref)
    h = h * s2_ref[...] + t2_ref[...]

    # Channel attention: avg/max pool over L per batch element, stacked so the
    # shared 2-layer 1x1-conv MLP runs as two matmuls; sigmoid via EUP exp+rcp.
    avg_rows, max_rows = [], []
    for b in range(nb):
        hb = h[b * L:(b + 1) * L]
        avg_rows.append(jnp.mean(hb, axis=0, keepdims=True))
        max_rows.append(jnp.max(hb, axis=0, keepdims=True))
    pools = jnp.concatenate(avg_rows + max_rows, axis=0)       # (2*nb, Cp)
    hid = jnp.maximum(
        jnp.dot(pools, caw1_ref[...], preferred_element_type=jnp.float32), 0.0)
    logits2 = jnp.dot(hid, caw2_ref[...], preferred_element_type=jnp.float32)
    logits = logits2[:nb] + logits2[nb:]                       # avg-path + max-path
    att = pl.reciprocal(1.0 + jnp.exp(-logits))                # sigmoid, (nb, Cp)

    # attention * h + residual, relu; single lane-dense store of the whole slab.
    outs = []
    for b in range(nb):
        sl = slice(b * L, (b + 1) * L)
        outs.append(jnp.maximum(h[sl] * att[b:b + 1, :] + x[sl], 0.0))
    out = outs[0] if nb == 1 else jnp.concatenate(outs, axis=0)
    o_ref[...] = out.astype(o_ref.dtype)


def _round_up(v, m):
    return ((v + m - 1) // m) * m


def _pad_last(x, axis, target):
    amt = target - x.shape[axis]
    if amt == 0:
        return x
    cfg = [(0, 0)] * x.ndim
    cfg[axis] = (0, amt)
    return jnp.pad(x, cfg)


def _pick_batch_block(n, l, target_rows=128, max_nb=8):
    """Largest (capped) divisor of n whose flattened row count reaches the MXU M target."""
    nb = 1
    for d in range(1, min(n, max_nb) + 1):
        if n % d == 0:
            nb = d
            if d * l >= target_rows:
                break
    return nb


@jax.jit
def rescbam_pallas(x_ncl, params):
    """x_ncl: (N, C, L) float32 (PyTorch NCL layout).  Returns (N, C, L)."""
    (w1, b1, s1, t1, w2, b2, s2, t2, caw1, caw2) = params
    N, C, L = x_ncl.shape
    K = w1.shape[0]
    Cr = caw1.shape[1]
    # TODO(synk): PyTorch padding='same' parity is only implemented for odd K.
    assert K % 2 == 1, "even kernel sizes not supported"

    LANE = 128
    Cp = _round_up(C, LANE)
    Crp = _round_up(Cr, LANE)

    # NCL -> NLC + channel lane-padding (fused by XLA under this jit), then
    # flatten batch into the matmul M dimension.
    # TODO(synk): if the surrounding model keeps activations in NLC with
    # C % 128 == 0, this transpose/pad (and the one on the way out) disappears.
    x_nlc = jnp.transpose(x_ncl.astype(jnp.float32), (0, 2, 1))      # (N, L, C)
    x_flat = _pad_last(x_nlc, 2, Cp).reshape(N * L, Cp)              # (N*L, Cp)

    w1p = _pad_last(_pad_last(w1, 1, Cp), 2, Cp)                     # (K, Cp, Cp)
    w2p = _pad_last(_pad_last(w2, 1, Cp), 2, Cp)
    b1p, s1p, t1p = (_pad_last(v, 1, Cp) for v in (b1, s1, t1))
    b2p, s2p, t2p = (_pad_last(v, 1, Cp) for v in (b2, s2, t2))
    caw1p = _pad_last(_pad_last(caw1, 0, Cp), 1, Crp)                # (Cp, Crp)
    caw2p = _pad_last(_pad_last(caw2, 0, Crp), 1, Cp)                # (Crp, Cp)

    NB = _pick_batch_block(N, L)   # batch elems folded into one block (M = NB*L)
    G = N // NB                    # 'parallel' grid -> feeds both v7x TensorCores when G >= 2
    M = NB * L
    assert G == 1 or M % 8 == 0

    kernel = functools.partial(rescbam_kernel, nb=NB, seq_len=L)
    const = lambda *shape: pl.BlockSpec(shape, lambda g: (0,) * len(shape))
    # TODO(synk): at production C, mark the grid-invariant weight specs
    # single-buffered (pipeline_mode=pl.Buffered(1)) and add an L-tiling axis to
    # stay inside v7x's 64 MiB VMEM.

    out_flat = pl.pallas_call(
        kernel,
        out_shape=jax.ShapeDtypeStruct((N * L, Cp), jnp.float32),
        grid_spec=pltpu.PrefetchScalarGridSpec(
            num_scalar_prefetch=0,
            grid=(G,),
            in_specs=[
                pl.BlockSpec((M, Cp), lambda g: (g, 0)),     # x rows for this chunk
                const(K, Cp, Cp),                            # w1
                const(1, Cp), const(1, Cp), const(1, Cp),    # b1, bn1 scale/shift
                const(K, Cp, Cp),                            # w2
                const(1, Cp), const(1, Cp), const(1, Cp),    # b2, bn2 scale/shift
                const(Cp, Crp),                              # CA fc1 (C, C//rf)
                const(Crp, Cp),                              # CA fc2 (C//rf, C)
            ],
            out_specs=pl.BlockSpec((M, Cp), lambda g: (g, 0)),
        ),
        compiler_params=pltpu.CompilerParams(
            dimension_semantics=("parallel",),
            vmem_limit_bytes=48 * 1024 * 1024),
    )(x_flat, w1p, b1p, s1p, t1p, w2p, b2p, s2p, t2p, caw1p, caw2p)

    out = out_flat.reshape(N, L, Cp)[:, :, :C]
    return jnp.transpose(out, (0, 2, 1))                             # NLC -> NCL


def make_params(key, C, K, rf):
    """Deterministic synthetic params mirroring the PyTorch module's shapes."""
    ks = jax.random.split(key, 14)
    Cr = max(C // rf, 1)
    eps = 1e-5

    # Conv1d weights in PyTorch layout (Cout, Cin, K), re-laid to (K, Cin, Cout).
    w1_t = jax.random.normal(ks[0], (C, C, K), jnp.float32) * 0.1
    b1 = jax.random.normal(ks[1], (C,), jnp.float32) * 0.1
    w2_t = jax.random.normal(ks[2], (C, C, K), jnp.float32) * 0.1
    b2 = jax.random.normal(ks[3], (C,), jnp.float32) * 0.1

    def bn(kg, kb, km, kv):
        gamma = 1.0 + 0.1 * jax.random.normal(kg, (C,), jnp.float32)
        beta = 0.1 * jax.random.normal(kb, (C,), jnp.float32)
        mean = 0.1 * jax.random.normal(km, (C,), jnp.float32)
        var = 0.5 + jnp.abs(jax.random.normal(kv, (C,), jnp.float32))
        scale = gamma / jnp.sqrt(var + eps)
        shift = beta - mean * scale
        return scale, shift

    s1, t1 = bn(ks[4], ks[5], ks[6], ks[7])
    s2, t2 = bn(ks[8], ks[9], ks[10], ks[11])     # distinct keys for bn2

    # ChannelAttention 1x1 convs (bias=False): PyTorch (Cr, C, 1) and (C, Cr, 1).
    ca1_t = jax.random.normal(ks[12], (Cr, C), jnp.float32) * 0.2
    ca2_t = jax.random.normal(ks[13], (C, Cr), jnp.float32) * 0.2

    return (
        jnp.transpose(w1_t, (2, 1, 0)),     # (K, Cin, Cout)
        b1.reshape(1, C),
        s1.reshape(1, C), t1.reshape(1, C),
        jnp.transpose(w2_t, (2, 1, 0)),
        b2.reshape(1, C),
        s2.reshape(1, C), t2.reshape(1, C),
        ca1_t.T,                            # (C, Cr)
        ca2_t.T,                            # (Cr, C)
    )


def rescbam_reference(x_ncl, params):
    """Plain-JAX reference with identical (eval-mode) semantics."""
    (w1, b1, s1, t1, w2, b2, s2, t2, caw1, caw2) = params
    N, C, L = x_ncl.shape
    K = w1.shape[0]
    pad = (K - 1) // 2
    x = jnp.transpose(x_ncl, (0, 2, 1)).astype(jnp.float32)    # (N, L, C)

    def conv_same(inp, w, b):
        xp = jnp.pad(inp, ((0, 0), (pad, K - 1 - pad), (0, 0)))
        acc = sum(jnp.einsum("nlc,co->nlo", xp[:, k:k + L, :], w[k])
                  for k in range(K))
        return acc + b[None]

    h = jnp.maximum(conv_same(x, w1, b1) * s1[None] + t1[None], 0.0)
    h = conv_same(h, w2, b2) * s2[None] + t2[None]
    avg_p = jnp.mean(h, axis=1, keepdims=True)
    max_p = jnp.max(h, axis=1, keepdims=True)
    fc = lambda p: jnp.maximum(p @ caw1, 0.0) @ caw2
    att = jax.nn.sigmoid(fc(avg_p) + fc(max_p))
    h = jnp.maximum(h * att + x, 0.0)
    return jnp.transpose(h, (0, 2, 1))


if __name__ == "__main__":
    # Small shapes consistent with the module (residual add requires
    # in_channels == channels; module top declares channels = 18).
    N, C, L = 2, 18, 64          # batch, channels, sequence length
    K, rf = 3, 2                 # kernel_size, channel-attention reduction

    key = jax.random.PRNGKey(0)
    kx, kp = jax.random.split(key)
    x = jax.random.normal(kx, (N, C, L), jnp.float32)
    params = make_params(kp, C, K, rf)

    out = jax.block_until_ready(rescbam_pallas(x, params))
    ref = jax.block_until_ready(rescbam_reference(x, params))

    assert out.shape == (N, C, L), out.shape
    err = float(jnp.max(jnp.abs(out - ref)))
    assert jnp.allclose(out, ref, rtol=1e-4, atol=1e-4), err
    print("KERNEL_OK")
</pallas_src>

<mosaic_0001>
module attributes {stable_mosaic.version = 11 : i64} {
  func.func @rescbam_kernel(%arg0: i32, %arg1: memref<128x128xf32, #tpu.memory_space<vmem>>, %arg2: memref<3x128x128xf32, #tpu.memory_space<vmem>>, %arg3: memref<1x128xf32, #tpu.memory_space<vmem>>, %arg4: memref<1x128xf32, #tpu.memory_space<vmem>>, %arg5: memref<1x128xf32, #tpu.memory_space<vmem>>, %arg6: memref<3x128x128xf32, #tpu.memory_space<vmem>>, %arg7: memref<1x128xf32, #tpu.memory_space<vmem>>, %arg8: memref<1x128xf32, #tpu.memory_space<vmem>>, %arg9: memref<1x128xf32, #tpu.memory_space<vmem>>, %arg10: memref<128x128xf32, #tpu.memory_space<vmem>>, %arg11: memref<128x128xf32, #tpu.memory_space<vmem>>, %arg12: memref<128x128xf32, #tpu.memory_space<vmem>>) attributes {dimension_semantics = [#tpu.dimension_semantics<parallel>], iteration_bounds = array<i64: 1>, scalar_prefetch = 0 : i64, scratch_operands = 0 : i64, tpu.core_type = #tpu.core_type<tc>, window_params = [{transform_indices = @transform_0, window_bounds = array<i64: 128, 128>}, {pipeline_mode = #tpu.pipeline_mode<synchronous>, transform_indices = @transform_1, window_bounds = array<i64: 3, 128, 128>}, {pipeline_mode = #tpu.pipeline_mode<synchronous>, transform_indices = @transform_2, window_bounds = array<i64: 1, 128>}, {pipeline_mode = #tpu.pipeline_mode<synchronous>, transform_indices = @transform_3, window_bounds = array<i64: 1, 128>}, {pipeline_mode = #tpu.pipeline_mode<synchronous>, transform_indices = @transform_4, window_bounds = array<i64: 1, 128>}, {pipeline_mode = #tpu.pipeline_mode<synchronous>, transform_indices = @transform_5, window_bounds = array<i64: 3, 128, 128>}, {pipeline_mode = #tpu.pipeline_mode<synchronous>, transform_indices = @transform_6, window_bounds = array<i64: 1, 128>}, {pipeline_mode = #tpu.pipeline_mode<synchronous>, transform_indices = @transform_7, window_bounds = array<i64: 1, 128>}, {pipeline_mode = #tpu.pipeline_mode<synchronous>, transform_indices = @transform_8, window_bounds = array<i64: 1, 128>}, {pipeline_mode = #tpu.pipeline_mode<synchronous>, transform_indices = @transform_9, window_bounds = array<i64: 128, 128>}, {pipeline_mode = #tpu.pipeline_mode<synchronous>, transform_indices = @transform_10, window_bounds = array<i64: 128, 128>}, {transform_indices = @transform_11, window_bounds = array<i64: 128, 128>}]} {
    %c0 = arith.constant 0 : index
    %c0_0 = arith.constant 0 : index
    %0 = vector.load %arg1[%c0, %c0_0] : memref<128x128xf32, #tpu.memory_space<vmem>>, vector<128x128xf32>
    %1 = tpu.iota {dimensions = array<i32: 0>} : vector<128x1xi32>
    %false = arith.constant false
    %2 = vector.broadcast %false : i1 to vector<128x1xi1>
    %c0_i32 = arith.constant 0 : i32
    %3 = vector.broadcast %c0_i32 : i32 to vector<128x1xi32>
    %4 = arith.cmpi sge, %1, %3 : vector<128x1xi32>
    %c1_i32 = arith.constant 1 : i32
    %5 = vector.broadcast %c1_i32 : i32 to vector<128x1xi32>
    %6 = arith.cmpi slt, %1, %5 : vector<128x1xi32>
    %7 = arith.andi %4, %6 : vector<128x1xi1>
    %8 = arith.ori %2, %7 : vector<128x1xi1>
    %c64_i32 = arith.constant 64 : i32
    %9 = vector.broadcast %c64_i32 : i32 to vector<128x1xi32>
    %10 = arith.cmpi sge, %1, %9 : vector<128x1xi32>
    %c65_i32 = arith.constant 65 : i32
    %11 = vector.broadcast %c65_i32 : i32 to vector<128x1xi32>
    %12 = arith.cmpi slt, %1, %11 : vector<128x1xi32>
    %13 = arith.andi %10, %12 : vector<128x1xi1>
    %14 = arith.ori %8, %13 : vector<128x1xi1>
    %cst = arith.constant dense<true> : vector<128x1xi1>
    %15 = arith.xori %14, %cst : vector<128x1xi1>
    %16 = arith.extui %15 : vector<128x1xi1> to vector<128x1xi32>
    %17 = arith.sitofp %16 : vector<128x1xi32> to vector<128x1xf32>
    %false_1 = arith.constant false
    %18 = vector.broadcast %false_1 : i1 to vector<128x1xi1>
    %c63_i32 = arith.constant 63 : i32
    %19 = vector.broadcast %c63_i32 : i32 to vector<128x1xi32>
    %20 = arith.cmpi sge, %1, %19 : vector<128x1xi32>
    %c64_i32_2 = arith.constant 64 : i32
    %21 = vector.broadcast %c64_i32_2 : i32 to vector<128x1xi32>
    %22 = arith.cmpi slt, %1, %21 : vector<128x1xi32>
    %23 = arith.andi %20, %22 : vector<128x1xi1>
    %24 = arith.ori %18, %23 : vector<128x1xi1>
    %c127_i32 = arith.constant 127 : i32
    %25 = vector.broadcast %c127_i32 : i32 to vector<128x1xi32>
    %26 = arith.cmpi sge, %1, %25 : vector<128x1xi32>
    %c128_i32 = arith.constant 128 : i32
    %27 = vector.broadcast %c128_i32 : i32 to vector<128x1xi32>
    %28 = arith.cmpi slt, %1, %27 : vector<128x1xi32>
    %29 = arith.andi %26, %28 : vector<128x1xi1>
    %30 = arith.ori %24, %29 : vector<128x1xi1>
    %cst_3 = arith.constant dense<true> : vector<128x1xi1>
    %31 = arith.xori %30, %cst_3 : vector<128x1xi1>
    %32 = arith.extui %31 : vector<128x1xi1> to vector<128x1xi32>
    %33 = arith.sitofp %32 : vector<128x1xi32> to vector<128x1xf32>
    %cst_4 = arith.constant 0.000000e+00 : f32
    %34 = vector.broadcast %cst_4 : f32 to vector<128x128xf32>
    %c0_5 = arith.constant 0 : index
    %c0_6 = arith.constant 0 : index
    %c0_7 = arith.constant 0 : index
    %35 = vector.load %arg2[%c0_5, %c0_6, %c0_7] : memref<3x128x128xf32, #tpu.memory_space<vmem>>, vector<1x128x128xf32>
    %36 = vector.shape_cast %35 : vector<1x128x128xf32> to vector<128x128xf32>
    %cst_8 = arith.constant dense<0.000000e+00> : vector<128x128xf32>
    %37 = tpu.matmul %0, %36, %cst_8 {dimension_numbers = #tpu.dot_dimension_numbers<[1], [0], [0], [1], [0, 0, 1, 1], [], []>} : vector<128x128xf32>, vector<128x128xf32>, vector<128x128xf32> -> vector<128x128xf32>
    %c1_i32_9 = arith.constant 1 : i32
    %38 = tpu.dynamic_rotate %37 by %c1_i32_9 dim 0 : vector<128x128xf32>, i32 -> vector<128x128xf32>
    %39 = vector.broadcast %17 : vector<128x1xf32> to vector<128x128xf32>
    %40 = arith.mulf %38, %39 : vector<128x128xf32>
    %41 = arith.addf %34, %40 : vector<128x128xf32>
    %c1 = arith.constant 1 : index
    %c0_10 = arith.constant 0 : index
    %c0_11 = arith.constant 0 : index
    %42 = vector.load %arg2[%c1, %c0_10, %c0_11] : memref<3x128x128xf32, #tpu.memory_space<vmem>>, vector<1x128x128xf32>
    %43 = vector.shape_cast %42 : vector<1x128x128xf32> to vector<128x128xf32>
    %cst_12 = arith.constant dense<0.000000e+00> : vector<128x128xf32>
    %44 = tpu.matmul %0, %43, %cst_12 {dimension_numbers = #tpu.dot_dimension_numbers<[1], [0], [0], [1], [0, 0, 1, 1], [], []>} : vector<128x128xf32>, vector<128x128xf32>, vector<128x128xf32> -> vector<128x128xf32>
    %45 = arith.addf %41, %44 : vector<128x128xf32>
    %c2 = arith.constant 2 : index
    %c0_13 = arith.constant 0 : index
    %c0_14 = arith.constant 0 : index
    %46 = vector.load %arg2[%c2, %c0_13, %c0_14] : memref<3x128x128xf32, #tpu.memory_space<vmem>>, vector<1x128x128xf32>
    %47 = vector.shape_cast %46 : vector<1x128x128xf32> to vector<128x128xf32>
    %cst_15 = arith.constant dense<0.000000e+00> : vector<128x128xf32>
    %48 = tpu.matmul %0, %47, %cst_15 {dimension_numbers = #tpu.dot_dimension_numbers<[1], [0], [0], [1], [0, 0, 1, 1], [], []>} : vector<128x128xf32>, vector<128x128xf32>, vector<128x128xf32> -> vector<128x128xf32>
    %c127_i32_16 = arith.constant 127 : i32
    %49 = tpu.dynamic_rotate %48 by %c127_i32_16 dim 0 : vector<128x128xf32>, i32 -> vector<128x128xf32>
    %50 = vector.broadcast %33 : vector<128x1xf32> to vector<128x128xf32>
    %51 = arith.mulf %49, %50 : vector<128x128xf32>
    %52 = arith.addf %45, %51 : vector<128x128xf32>
    %c0_17 = arith.constant 0 : index
    %c0_18 = arith.constant 0 : index
    %53 = vector.load %arg3[%c0_17, %c0_18] : memref<1x128xf32, #tpu.memory_space<vmem>>, vector<1x128xf32>
    %54 = vector.broadcast %53 : vector<1x128xf32> to vector<128x128xf32>
    %55 = arith.addf %52, %54 : vector<128x128xf32>
    %c0_19 = arith.constant 0 : index
    %c0_20 = arith.constant 0 : index
    %56 = vector.load %arg4[%c0_19, %c0_20] : memref<1x128xf32, #tpu.memory_space<vmem>>, vector<1x128xf32>
    %57 = vector.broadcast %56 : vector<1x128xf32> to vector<128x128xf32>
    %58 = arith.mulf %55, %57 : vector<128x128xf32>
    %c0_21 = arith.constant 0 : index
    %c0_22 = arith.constant 0 : index
    %59 = vector.load %arg5[%c0_21, %c0_22] : memref<1x128xf32, #tpu.memory_space<vmem>>, vector<1x128xf32>
    %60 = vector.broadcast %59 : vector<1x128xf32> to vector<128x128xf32>
    %61 = arith.addf %58, %60 : vector<128x128xf32>
    %cst_23 = arith.constant 0.000000e+00 : f32
    %62 = vector.broadcast %cst_23 : f32 to vector<128x128xf32>
    %63 = arith.maximumf %61, %62 : vector<128x128xf32>
    %cst_24 = arith.constant 0.000000e+00 : f32
    %64 = vector.broadcast %cst_24 : f32 to vector<128x128xf32>
    %c0_25 = arith.constant 0 : index
    %c0_26 = arith.constant 0 : index
    %c0_27 = arith.constant 0 : index
    %65 = vector.load %arg6[%c0_25, %c0_26, %c0_27] : memref<3x128x128xf32, #tpu.memory_space<vmem>>, vector<1x128x128xf32>
    %66 = vector.shape_cast %65 : vector<1x128x128xf32> to vector<128x128xf32>
    %cst_28 = arith.constant dense<0.000000e+00> : vector<128x128xf32>
    %67 = tpu.matmul %63, %66, %cst_28 {dimension_numbers = #tpu.dot_dimension_numbers<[1], [0], [0], [1], [0, 0, 1, 1], [], []>} : vector<128x128xf32>, vector<128x128xf32>, vector<128x128xf32> -> vector<128x128xf32>
    %c1_i32_29 = arith.constant 1 : i32
    %68 = tpu.dynamic_rotate %67 by %c1_i32_29 dim 0 : vector<128x128xf32>, i32 -> vector<128x128xf32>
    %69 = vector.broadcast %17 : vector<128x1xf32> to vector<128x128xf32>
    %70 = arith.mulf %68, %69 : vector<128x128xf32>
    %71 = arith.addf %64, %70 : vector<128x128xf32>
    %c1_30 = arith.constant 1 : index
    %c0_31 = arith.constant 0 : index
    %c0_32 = arith.constant 0 : index
    %72 = vector.load %arg6[%c1_30, %c0_31, %c0_32] : memref<3x128x128xf32, #tpu.memory_space<vmem>>, vector<1x128x128xf32>
    %73 = vector.shape_cast %72 : vector<1x128x128xf32> to vector<128x128xf32>
    %cst_33 = arith.constant dense<0.000000e+00> : vector<128x128xf32>
    %74 = tpu.matmul %63, %73, %cst_33 {dimension_numbers = #tpu.dot_dimension_numbers<[1], [0], [0], [1], [0, 0, 1, 1], [], []>} : vector<128x128xf32>, vector<128x128xf32>, vector<128x128xf32> -> vector<128x128xf32>
    %75 = arith.addf %71, %74 : vector<128x128xf32>
    %c2_34 = arith.constant 2 : index
    %c0_35 = arith.constant 0 : index
    %c0_36 = arith.constant 0 : index
    %76 = vector.load %arg6[%c2_34, %c0_35, %c0_36] : memref<3x128x128xf32, #tpu.memory_space<vmem>>, vector<1x128x128xf32>
    %77 = vector.shape_cast %76 : vector<1x128x128xf32> to vector<128x128xf32>
    %cst_37 = arith.constant dense<0.000000e+00> : vector<128x128xf32>
    %78 = tpu.matmul %63, %77, %cst_37 {dimension_numbers = #tpu.dot_dimension_numbers<[1], [0], [0], [1], [0, 0, 1, 1], [], []>} : vector<128x128xf32>, vector<128x128xf32>, vector<128x128xf32> -> vector<128x128xf32>
    %c127_i32_38 = arith.constant 127 : i32
    %79 = tpu.dynamic_rotate %78 by %c127_i32_38 dim 0 : vector<128x128xf32>, i32 -> vector<128x128xf32>
    %80 = vector.broadcast %33 : vector<128x1xf32> to vector<128x128xf32>
    %81 = arith.mulf %79, %80 : vector<128x128xf32>
    %82 = arith.addf %75, %81 : vector<128x128xf32>
    %c0_39 = arith.constant 0 : index
    %c0_40 = arith.constant 0 : index
    %83 = vector.load %arg7[%c0_39, %c0_40] : memref<1x128xf32, #tpu.memory_space<vmem>>, vector<1x128xf32>
    %84 = vector.broadcast %83 : vector<1x128xf32> to vector<128x128xf32>
    %85 = arith.addf %82, %84 : vector<128x128xf32>
    %c0_41 = arith.constant 0 : index
    %c0_42 = arith.constant 0 : index
    %86 = vector.load %arg8[%c0_41, %c0_42] : memref<1x128xf32, #tpu.memory_space<vmem>>, vector<1x128xf32>
    %87 = vector.broadcast %86 : vector<1x128xf32> to vector<128x128xf32>
    %88 = arith.mulf %85, %87 : vector<128x128xf32>
    %c0_43 = arith.constant 0 : index
    %c0_44 = arith.constant 0 : index
    %89 = vector.load %arg9[%c0_43, %c0_44] : memref<1x128xf32, #tpu.memory_space<vmem>>, vector<1x128xf32>
    %90 = vector.broadcast %89 : vector<1x128xf32> to vector<128x128xf32>
    %91 = arith.addf %88, %90 : vector<128x128xf32>
    %92 = vector.extract_strided_slice %91 {offsets = [0, 0], sizes = [64, 128], strides = [1, 1]} : vector<128x128xf32> to vector<64x128xf32>
    %cst_45 = arith.constant dense<0.000000e+00> : vector<128xf32>
    %93 = vector.multi_reduction <add>, %92, %cst_45 [0] : vector<64x128xf32> to vector<128xf32>
    %94 = vector.shape_cast %93 : vector<128xf32> to vector<1x128xf32>
    %cst_46 = arith.constant 6.400000e+01 : f32
    %95 = vector.broadcast %cst_46 : f32 to vector<1x128xf32>
    %96 = arith.divf %94, %95 : vector<1x128xf32>
    %cst_47 = arith.constant dense<0xFF800000> : vector<128xf32>
    %97 = vector.multi_reduction <maximumf>, %92, %cst_47 [0] : vector<64x128xf32> to vector<128xf32>
    %98 = vector.shape_cast %97 : vector<128xf32> to vector<1x128xf32>
    %99 = vector.extract_strided_slice %91 {offsets = [64, 0], sizes = [64, 128], strides = [1, 1]} : vector<128x128xf32> to vector<64x128xf32>
    %cst_48 = arith.constant dense<0.000000e+00> : vector<128xf32>
    %100 = vector.multi_reduction <add>, %99, %cst_48 [0] : vector<64x128xf32> to vector<128xf32>
    %101 = vector.shape_cast %100 : vector<128xf32> to vector<1x128xf32>
    %cst_49 = arith.constant 6.400000e+01 : f32
    %102 = vector.broadcast %cst_49 : f32 to vector<1x128xf32>
    %103 = arith.divf %101, %102 : vector<1x128xf32>
    %cst_50 = arith.constant dense<0xFF800000> : vector<128xf32>
    %104 = vector.multi_reduction <maximumf>, %99, %cst_50 [0] : vector<64x128xf32> to vector<128xf32>
    %105 = vector.shape_cast %104 : vector<128xf32> to vector<1x128xf32>
    %106 = tpu.concatenate %96, %103, %98, %105 in 0 : vector<1x128xf32>, vector<1x128xf32>, vector<1x128xf32>, vector<1x128xf32> -> vector<4x128xf32>
    %c0_51 = arith.constant 0 : index
    %c0_52 = arith.constant 0 : index
    %107 = vector.load %arg10[%c0_51, %c0_52] : memref<128x128xf32, #tpu.memory_space<vmem>>, vector<128x128xf32>
    %cst_53 = arith.constant dense<0.000000e+00> : vector<4x128xf32>
    %108 = tpu.matmul %106, %107, %cst_53 {dimension_numbers = #tpu.dot_dimension_numbers<[1], [0], [0], [1], [0, 0, 1, 1], [], []>} : vector<4x128xf32>, vector<128x128xf32>, vector<4x128xf32> -> vector<4x128xf32>
    %cst_54 = arith.constant 0.000000e+00 : f32
    %109 = vector.broadcast %cst_54 : f32 to vector<4x128xf32>
    %110 = arith.maximumf %108, %109 : vector<4x128xf32>
    %c0_55 = arith.constant 0 : index
    %c0_56 = arith.constant 0 : index
    %111 = vector.load %arg11[%c0_55, %c0_56] : memref<128x128xf32, #tpu.memory_space<vmem>>, vector<128x128xf32>
    %cst_57 = arith.constant dense<0.000000e+00> : vector<4x128xf32>
    %112 = tpu.matmul %110, %111, %cst_57 {dimension_numbers = #tpu.dot_dimension_numbers<[1], [0], [0], [1], [0, 0, 1, 1], [], []>} : vector<4x128xf32>, vector<128x128xf32>, vector<4x128xf32> -> vector<4x128xf32>
    %113 = vector.extract_strided_slice %112 {offsets = [0, 0], sizes = [2, 128], strides = [1, 1]} : vector<4x128xf32> to vector<2x128xf32>
    %114 = vector.extract_strided_slice %112 {offsets = [2, 0], sizes = [2, 128], strides = [1, 1]} : vector<4x128xf32> to vector<2x128xf32>
    %115 = arith.addf %113, %114 : vector<2x128xf32>
    %cst_58 = arith.constant 0.000000e+00 : f32
    %116 = vector.broadcast %cst_58 : f32 to vector<2x128xf32>
    %117 = arith.subf %116, %115 : vector<2x128xf32>
    %118 = math.exp %117 : vector<2x128xf32>
    %cst_59 = arith.constant 1.000000e+00 : f32
    %119 = vector.broadcast %cst_59 : f32 to vector<2x128xf32>
    %120 = arith.addf %119, %118 : vector<2x128xf32>
    %121 = tpu.reciprocal %120 : vector<2x128xf32> -> vector<2x128xf32>
    %122 = vector.extract_strided_slice %91 {offsets = [0, 0], sizes = [64, 128], strides = [1, 1]} : vector<128x128xf32> to vector<64x128xf32>
    %123 = vector.extract_strided_slice %121 {offsets = [0, 0], sizes = [1, 128], strides = [1, 1]} : vector<2x128xf32> to vector<1x128xf32>
    %124 = vector.broadcast %123 : vector<1x128xf32> to vector<64x128xf32>
    %125 = arith.mulf %122, %124 : vector<64x128xf32>
    %126 = vector.extract_strided_slice %0 {offsets = [0, 0], sizes = [64, 128], strides = [1, 1]} : vector<128x128xf32> to vector<64x128xf32>
    %127 = arith.addf %125, %126 : vector<64x128xf32>
    %cst_60 = arith.constant 0.000000e+00 : f32
    %128 = vector.broadcast %cst_60 : f32 to vector<64x128xf32>
    %129 = arith.maximumf %127, %128 : vector<64x128xf32>
    %130 = vector.extract_strided_slice %91 {offsets = [64, 0], sizes = [64, 128], strides = [1, 1]} : vector<128x128xf32> to vector<64x128xf32>
    %131 = vector.extract_strided_slice %121 {offsets = [1, 0], sizes = [1, 128], strides = [1, 1]} : vector<2x128xf32> to vector<1x128xf32>
    %132 = vector.broadcast %131 : vector<1x128xf32> to vector<64x128xf32>
    %133 = arith.mulf %130, %132 : vector<64x128xf32>
    %134 = vector.extract_strided_slice %0 {offsets = [64, 0], sizes = [64, 128], strides = [1, 1]} : vector<128x128xf32> to vector<64x128xf32>
    %135 = arith.addf %133, %134 : vector<64x128xf32>
    %cst_61 = arith.constant 0.000000e+00 : f32
    %136 = vector.broadcast %cst_61 : f32 to vector<64x128xf32>
    %137 = arith.maximumf %135, %136 : vector<64x128xf32>
    %138 = tpu.concatenate %129, %137 in 0 : vector<64x128xf32>, vector<64x128xf32> -> vector<128x128xf32>
    %c0_62 = arith.constant 0 : index
    %c0_63 = arith.constant 0 : index
    %139 = vector.load %arg12[%c0_62, %c0_63] : memref<128x128xf32, #tpu.memory_space<vmem>>, vector<128x128xf32>
    tpu.vector_store %arg12[%c0_62, %c0_63], %138 {strides = array<i32>} : memref<128x128xf32, #tpu.memory_space<vmem>>, vector<128x128xf32>,
    return
  }
  func.func @transform_0(%arg0: i32) -> (i32, i32) {
    %c0_i32 = arith.constant 0 : i32
    %c0_i32_0 = arith.constant 0 : i32
    return %arg0, %c0_i32 : i32, i32
  }
  func.func @transform_1(%arg0: i32) -> (i32, i32, i32) {
    %c0_i32 = arith.constant 0 : i32
    %c0_i32_0 = arith.constant 0 : i32
    %c0_i32_1 = arith.constant 0 : i32
    %c0_i32_2 = arith.constant 0 : i32
    return %c0_i32, %c0_i32_0, %c0_i32_1 : i32, i32, i32
  }
  func.func @transform_2(%arg0: i32) -> (i32, i32) {
    %c0_i32 = arith.constant 0 : i32
    %c0_i32_0 = arith.constant 0 : i32
    %c0_i32_1 = arith.constant 0 : i32
    return %c0_i32, %c0_i32_0 : i32, i32
  }
  func.func @transform_3(%arg0: i32) -> (i32, i32) {
    %c0_i32 = arith.constant 0 : i32
    %c0_i32_0 = arith.constant 0 : i32
    %c0_i32_1 = arith.constant 0 : i32
    return %c0_i32, %c0_i32_0 : i32, i32
  }
  func.func @transform_4(%arg0: i32) -> (i32, i32) {
    %c0_i32 = arith.constant 0 : i32
    %c0_i32_0 = arith.constant 0 : i32
    %c0_i32_1 = arith.constant 0 : i32
    return %c0_i32, %c0_i32_0 : i32, i32
  }
  func.func @transform_5(%arg0: i32) -> (i32, i32, i32) {
    %c0_i32 = arith.constant 0 : i32
    %c0_i32_0 = arith.constant 0 : i32
    %c0_i32_1 = arith.constant 0 : i32
    %c0_i32_2 = arith.constant 0 : i32
    return %c0_i32, %c0_i32_0, %c0_i32_1 : i32, i32, i32
  }
  func.func @transform_6(%arg0: i32) -> (i32, i32) {
    %c0_i32 = arith.constant 0 : i32
    %c0_i32_0 = arith.constant 0 : i32
    %c0_i32_1 = arith.constant 0 : i32
    return %c0_i32, %c0_i32_0 : i32, i32
  }
  func.func @transform_7(%arg0: i32) -> (i32, i32) {
    %c0_i32 = arith.constant 0 : i32
    %c0_i32_0 = arith.constant 0 : i32
    %c0_i32_1 = arith.constant 0 : i32
    return %c0_i32, %c0_i32_0 : i32, i32
  }
  func.func @transform_8(%arg0: i32) -> (i32, i32) {
    %c0_i32 = arith.constant 0 : i32
    %c0_i32_0 = arith.constant 0 : i32
    %c0_i32_1 = arith.constant 0 : i32
    return %c0_i32, %c0_i32_0 : i32, i32
  }
  func.func @transform_9(%arg0: i32) -> (i32, i32) {
    %c0_i32 = arith.constant 0 : i32
    %c0_i32_0 = arith.constant 0 : i32
    %c0_i32_1 = arith.constant 0 : i32
    return %c0_i32, %c0_i32_0 : i32, i32
  }
  func.func @transform_10(%arg0: i32) -> (i32, i32) {
    %c0_i32 = arith.constant 0 : i32
    %c0_i32_0 = arith.constant 0 : i32
    %c0_i32_1 = arith.constant 0 : i32
    return %c0_i32, %c0_i32_0 : i32, i32
  }
  func.func @transform_11(%arg0: i32) -> (i32, i32) {
    %c0_i32 = arith.constant 0 : i32
    %c0_i32_0 = arith.constant 0 : i32
    return %arg0, %c0_i32 : i32, i32
  }
}

</mosaic_0001>

<llo_original>
// kernel: rescbam_pallas.1
$region0: #{rescbam_pallas.1}
  #allocation0 [shape = 'u32[]', space=smem, size = 0x4, offset = 0x4, fixed_abs, tag = 'smem constant byte address 0x4 - core index']
  #allocation1 [shape = 'u32[72,128]{1,0:T(1,128)}', space=vmem, size = 0x9000, scoped, tag = 'internal scratch']
  %s0 = inlined_call_operand.vmem [shape: f32[128,128], index: 0, kind: input, shape index: {}]
  %s1 = inlined_call_operand.vmem [shape: f32[3,128,128], index: 1, kind: input, shape index: {}]
  %s2 = inlined_call_operand.vmem [shape: f32[1,128], index: 2, kind: input, shape index: {}]
  %s3 = inlined_call_operand.vmem [shape: f32[1,128], index: 3, kind: input, shape index: {}]
  %s4 = inlined_call_operand.vmem [shape: f32[1,128], index: 4, kind: input, shape index: {}]
  %s5 = inlined_call_operand.vmem [shape: f32[3,128,128], index: 5, kind: input, shape index: {}]
  %s6 = inlined_call_operand.vmem [shape: f32[1,128], index: 6, kind: input, shape index: {}]
  %s7 = inlined_call_operand.vmem [shape: f32[1,128], index: 7, kind: input, shape index: {}]
  %s8 = inlined_call_operand.vmem [shape: f32[1,128], index: 8, kind: input, shape index: {}]
  %s9 = inlined_call_operand.vmem [shape: f32[128,128], index: 9, kind: input, shape index: {}]
  %s10 = inlined_call_operand.vmem [shape: f32[128,128], index: 10, kind: input, shape index: {}]
  %s11 = inlined_call_operand.vmem [shape: f32[128,128], index: 11, kind: output, shape index: {}]
  %s12 = sld [smem:[#allocation0]]
  $region54: #{rescbam_pallas.1} parent=0
    _
  %s14 = ssub.s32 1, %s12
  %s15 = scalar_select 0, %s14, %s12
  // Predicated region
  $region2: #{rescbam_pallas.1} parent=0 // pred_check
    _
  $region3: #{rescbam_pallas.1} parent=0 // pred_check_branch
    %17 = sbr.rel (0) target = $region5
  $region4: #{rescbam_pallas.1} parent=0 // pred_region
    _
  $region5: #{rescbam_pallas.1} parent=0 // pred_fallthru
    _
  // Predicated region
  $region6: #{rescbam_pallas.1} parent=0 // pred_check
    _
  $region7: #{rescbam_pallas.1} parent=0 // pred_check_branch
    %19 = sbr.rel (0) target = $region9
  $region8: #{rescbam_pallas.1} parent=0 // pred_region
    _
  $region9: #{rescbam_pallas.1} parent=0 // pred_fallthru
    _
  // Predicated region
  $region10: #{rescbam_pallas.1} parent=0 // pred_check
    _
  $region11: #{rescbam_pallas.1} parent=0 // pred_check_branch
    %21 = sbr.rel (0) target = $region13
  $region12: #{rescbam_pallas.1} parent=0 // pred_region
    _
  $region13: #{rescbam_pallas.1} parent=0 // pred_fallthru
    _
  // Predicated region
  $region14: #{rescbam_pallas.1} parent=0 // pred_check
    _
  $region15: #{rescbam_pallas.1} parent=0 // pred_check_branch
    %23 = sbr.rel (0) target = $region17
  $region16: #{rescbam_pallas.1} parent=0 // pred_region
    _
  $region17: #{rescbam_pallas.1} parent=0 // pred_fallthru
    _
  // Predicated region
  $region18: #{rescbam_pallas.1} parent=0 // pred_check
    _
  $region19: #{rescbam_pallas.1} parent=0 // pred_check_branch
    %25 = sbr.rel (0) target = $region21
  $region20: #{rescbam_pallas.1} parent=0 // pred_region
    _
  $region21: #{rescbam_pallas.1} parent=0 // pred_fallthru
    _
  // Predicated region
  $region22: #{rescbam_pallas.1} parent=0 // pred_check
    _
  $region23: #{rescbam_pallas.1} parent=0 // pred_check_branch
    %27 = sbr.rel (0) target = $region25
  $region24: #{rescbam_pallas.1} parent=0 // pred_region
    _
  $region25: #{rescbam_pallas.1} parent=0 // pred_fallthru
    _
  // Predicated region
  $region26: #{rescbam_pallas.1} parent=0 // pred_check
    _
  $region27: #{rescbam_pallas.1} parent=0 // pred_check_branch
    %29 = sbr.rel (0) target = $region29
  $region28: #{rescbam_pallas.1} parent=0 // pred_region
    _
  $region29: #{rescbam_pallas.1} parent=0 // pred_fallthru
    _
  // Predicated region
  $region30: #{rescbam_pallas.1} parent=0 // pred_check
    _
  $region31: #{rescbam_pallas.1} parent=0 // pred_check_branch
    %31 = sbr.rel (0) target = $region33
  $region32: #{rescbam_pallas.1} parent=0 // pred_region
    _
  $region33: #{rescbam_pallas.1} parent=0 // pred_fallthru
    _
  // Predicated region
  $region34: #{rescbam_pallas.1} parent=0 // pred_check
    _
  $region35: #{rescbam_pallas.1} parent=0 // pred_check_branch
    %33 = sbr.rel (0) target = $region37
  $region36: #{rescbam_pallas.1} parent=0 // pred_region
    _
  $region37: #{rescbam_pallas.1} parent=0 // pred_fallthru
    _
  // Predicated region
  $region38: #{rescbam_pallas.1} parent=0 // pred_check
    _
  $region39: #{rescbam_pallas.1} parent=0 // pred_check_branch
    %35 = sbr.rel (0) target = $region41
  $region40: #{rescbam_pallas.1} parent=0 // pred_region
    _
  $region41: #{rescbam_pallas.1} parent=0 // pred_fallthru
    _
  // Predicated region
  $region42: #{rescbam_pallas.1} parent=0 // pred_check
    _
  $region43: #{rescbam_pallas.1} parent=0 // pred_check_branch
    %37 = sbr.rel (0) target = $region45
  $region44: #{rescbam_pallas.1} parent=0 // pred_region
    _
  $region45: #{rescbam_pallas.1} parent=0 // pred_fallthru
    _
  %v38 = vld [vmem:[%s0] sm:$0xff]
  %v39 = vld [vmem:[%s0 + $0x8] sm:$0xff]
  %v40 = vld [vmem:[%s0 + $0x10] sm:$0xff]
  %v41 = vld [vmem:[%s0 + $0x18] sm:$0xff]
  %v42 = vld [vmem:[%s0 + $0x20] sm:$0xff]
  %v43 = vld [vmem:[%s0 + $0x28] sm:$0xff]
  %v44 = vld [vmem:[%s0 + $0x30] sm:$0xff]
  %v45 = vld [vmem:[%s0 + $0x38] sm:$0xff]
  %v46 = vld [vmem:[%s0 + $0x40] sm:$0xff]
  %v47 = vld [vmem:[%s0 + $0x48] sm:$0xff]
  %v48 = vld [vmem:[%s0 + $0x50] sm:$0xff]
  %v49 = vld [vmem:[%s0 + $0x58] sm:$0xff]
  %v50 = vld [vmem:[%s0 + $0x60] sm:$0xff]
  %v51 = vld [vmem:[%s0 + $0x68] sm:$0xff]
  %v52 = vld [vmem:[%s0 + $0x70] sm:$0xff]
  %v53 = vld [vmem:[%s0 + $0x78] sm:$0xff]
  %v54 = vlaneseq
  %v55 = vshrl.u32 %v54, 7
  %v56 = vadd.s32 %v55, 8
  %v57 = vadd.s32 %v55, 16
  %v58 = vadd.s32 %v55, 24
  %v59 = vadd.s32 %v55, 32
  %v60 = vadd.s32 %v55, 40
  %v61 = vadd.s32 %v55, 48
  %v62 = vadd.s32 %v55, 56
  %v63 = vadd.s32 %v55, 64
  %v64 = vadd.s32 %v55, 72
  %v65 = vadd.s32 %v55, 80
  %v66 = vadd.s32 %v55, 88
  %v67 = vadd.s32 %v55, 96
  %v68 = vadd.s32 %v55, 104
  %v69 = vadd.s32 %v55, 112
  %v70 = vadd.s32 %v55, 120
  %vm71 = vcmp.ge.s32.totalorder %v55, 0
  %vm72 = vcmp.ge.s32.totalorder %v56, 0
  %vm73 = vcmp.ge.s32.totalorder %v57, 0
  %vm74 = vcmp.ge.s32.totalorder %v58, 0
  %vm75 = vcmp.ge.s32.totalorder %v59, 0
  %vm76 = vcmp.ge.s32.totalorder %v60, 0
  %vm77 = vcmp.ge.s32.totalorder %v61, 0
  %vm78 = vcmp.ge.s32.totalorder %v62, 0
  %vm79 = vcmp.ge.s32.totalorder %v63, 0
  %vm80 = vcmp.ge.s32.totalorder %v64, 0
  %vm81 = vcmp.ge.s32.totalorder %v65, 0
  %vm82 = vcmp.ge.s32.totalorder %v66, 0
  %vm83 = vcmp.ge.s32.totalorder %v67, 0
  %vm84 = vcmp.ge.s32.totalorder %v68, 0
  %vm85 = vcmp.ge.s32.totalorder %v69, 0
  %vm86 = vcmp.ge.s32.totalorder %v70, 0
  %vm87 = vcmp.lt.s32.totalorder %v55, 1
  %vm88 = vcmp.lt.s32.totalorder %v56, 1
  %vm89 = vcmp.lt.s32.totalorder %v57, 1
  %vm90 = vcmp.lt.s32.totalorder %v58, 1
  %vm91 = vcmp.lt.s32.totalorder %v59, 1
  %vm92 = vcmp.lt.s32.totalorder %v60, 1
  %vm93 = vcmp.lt.s32.totalorder %v61, 1
  %vm94 = vcmp.lt.s32.totalorder %v62, 1
  %vm95 = vcmp.lt.s32.totalorder %v63, 1
  %vm96 = vcmp.lt.s32.totalorder %v64, 1
  %vm97 = vcmp.lt.s32.totalorder %v65, 1
  %vm98 = vcmp.lt.s32.totalorder %v66, 1
  %vm99 = vcmp.lt.s32.totalorder %v67, 1
  %vm100 = vcmp.lt.s32.totalorder %v68, 1
  %vm101 = vcmp.lt.s32.totalorder %v69, 1
  %vm102 = vcmp.lt.s32.totalorder %v70, 1
  %vm103 = vmand %vm71, %vm87
  %vm104 = vmand %vm72, %vm88
  %vm105 = vmand %vm73, %vm89
  %vm106 = vmand %vm74, %vm90
  %vm107 = vmand %vm75, %vm91
  %vm108 = vmand %vm76, %vm92
  %vm109 = vmand %vm77, %vm93
  %vm110 = vmand %vm78, %vm94
  %vm111 = vmand %vm79, %vm95
  %vm112 = vmand %vm80, %vm96
  %vm113 = vmand %vm81, %vm97
  %vm114 = vmand %vm82, %vm98
  %vm115 = vmand %vm83, %vm99
  %vm116 = vmand %vm84, %vm100
  %vm117 = vmand %vm85, %vm101
  %vm118 = vmand %vm86, %vm102
  %vm119 = vcmp.ge.s32.totalorder %v55, 64
  %vm120 = vcmp.ge.s32.totalorder %v56, 64
  %vm121 = vcmp.ge.s32.totalorder %v57, 64
  %vm122 = vcmp.ge.s32.totalorder %v58, 64
  %vm123 = vcmp.ge.s32.totalorder %v59, 64
  %vm124 = vcmp.ge.s32.totalorder %v60, 64
  %vm125 = vcmp.ge.s32.totalorder %v61, 64
  %vm126 = vcmp.ge.s32.totalorder %v62, 64
  %vm127 = vcmp.ge.s32.totalorder %v63, 64
  %vm128 = vcmp.ge.s32.totalorder %v64, 64
  %vm129 = vcmp.ge.s32.totalorder %v65, 64
  %vm130 = vcmp.ge.s32.totalorder %v66, 64
  %vm131 = vcmp.ge.s32.totalorder %v67, 64
  %vm132 = vcmp.ge.s32.totalorder %v68, 64
  %vm133 = vcmp.ge.s32.totalorder %v69, 64
  %vm134 = vcmp.ge.s32.totalorder %v70, 64
  %vm135 = vcmp.lt.s32.totalorder %v55, 65
  %vm136 = vcmp.lt.s32.totalorder %v56, 65
  %vm137 = vcmp.lt.s32.totalorder %v57, 65
  %vm138 = vcmp.lt.s32.totalorder %v58, 65
  %vm139 = vcmp.lt.s32.totalorder %v59, 65
  %vm140 = vcmp.lt.s32.totalorder %v60, 65
  %vm141 = vcmp.lt.s32.totalorder %v61, 65
  %vm142 = vcmp.lt.s32.totalorder %v62, 65
  %vm143 = vcmp.lt.s32.totalorder %v63, 65
  %vm144 = vcmp.lt.s32.totalorder %v64, 65
  %vm145 = vcmp.lt.s32.totalorder %v65, 65
  %vm146 = vcmp.lt.s32.totalorder %v66, 65
  %vm147 = vcmp.lt.s32.totalorder %v67, 65
  %vm148 = vcmp.lt.s32.totalorder %v68, 65
  %vm149 = vcmp.lt.s32.totalorder %v69, 65
  %vm150 = vcmp.lt.s32.totalorder %v70, 65
  %vm151 = vmand %vm119, %vm135
  %vm152 = vmand %vm120, %vm136
  %vm153 = vmand %vm121, %vm137
  %vm154 = vmand %vm122, %vm138
  %vm155 = vmand %vm123, %vm139
  %vm156 = vmand %vm124, %vm140
  %vm157 = vmand %vm125, %vm141
  %vm158 = vmand %vm126, %vm142
  %vm159 = vmand %vm127, %vm143
  %vm160 = vmand %vm128, %vm144
  %vm161 = vmand %vm129, %vm145
  %vm162 = vmand %vm130, %vm146
  %vm163 = vmand %vm131, %vm147
  %vm164 = vmand %vm132, %vm148
  %vm165 = vmand %vm133, %vm149
  %vm166 = vmand %vm134, %vm150
  %vm167 = vmor %vm103, %vm151
  %vm168 = vmor %vm104, %vm152
  %vm169 = vmor %vm105, %vm153
  %vm170 = vmor %vm106, %vm154
  %vm171 = vmor %vm107, %vm155
  %vm172 = vmor %vm108, %vm156
  %vm173 = vmor %vm109, %vm157
  %vm174 = vmor %vm110, %vm158
  %vm175 = vmor %vm111, %vm159
  %vm176 = vmor %vm112, %vm160
  %vm177 = vmor %vm113, %vm161
  %vm178 = vmor %vm114, %vm162
  %vm179 = vmor %vm115, %vm163
  %vm180 = vmor %vm116, %vm164
  %vm181 = vmor %vm117, %vm165
  %vm182 = vmor %vm118, %vm166
  %vm183 = vmxor %vm167, 1
  %vm184 = vmxor %vm168, 1
  %vm185 = vmxor %vm169, 1
  %vm186 = vmxor %vm170, 1
  %vm187 = vmxor %vm171, 1
  %vm188 = vmxor %vm172, 1
  %vm189 = vmxor %vm173, 1
  %vm190 = vmxor %vm174, 1
  %vm191 = vmxor %vm175, 1
  %vm192 = vmxor %vm176, 1
  %vm193 = vmxor %vm177, 1
  %vm194 = vmxor %vm178, 1
  %vm195 = vmxor %vm179, 1
  %vm196 = vmxor %vm180, 1
  %vm197 = vmxor %vm181, 1
  %vm198 = vmxor %vm182, 1
  %v199 = vsel %vm183, 1, 0
  %v200 = vsel %vm184, 1, 0
  %v201 = vsel %vm185, 1, 0
  %v202 = vsel %vm186, 1, 0
  %v203 = vsel %vm187, 1, 0
  %v204 = vsel %vm188, 1, 0
  %v205 = vsel %vm189, 1, 0
  %v206 = vsel %vm190, 1, 0
  %v207 = vsel %vm191, 1, 0
  %v208 = vsel %vm192, 1, 0
  %v209 = vsel %vm193, 1, 0
  %v210 = vsel %vm194, 1, 0
  %v211 = vsel %vm195, 1, 0
  %v212 = vsel %vm196, 1, 0
  %v213 = vsel %vm197, 1, 0
  %v214 = vsel %vm198, 1, 0
  %v215 = vcvt.s32.f32 %v199
  %v216 = vcvt.s32.f32 %v200
  %v217 = vcvt.s32.f32 %v201
  %v218 = vcvt.s32.f32 %v202
  %v219 = vcvt.s32.f32 %v203
  %v220 = vcvt.s32.f32 %v204
  %v221 = vcvt.s32.f32 %v205
  %v222 = vcvt.s32.f32 %v206
  %v223 = vcvt.s32.f32 %v207
  %v224 = vcvt.s32.f32 %v208
  %v225 = vcvt.s32.f32 %v209
  %v226 = vcvt.s32.f32 %v210
  %v227 = vcvt.s32.f32 %v211
  %v228 = vcvt.s32.f32 %v212
  %v229 = vcvt.s32.f32 %v213
  %v230 = vcvt.s32.f32 %v214
  %vm231 = vcmp.ge.s32.totalorder %v55, 63
  %vm232 = vcmp.ge.s32.totalorder %v56, 63
  %vm233 = vcmp.ge.s32.totalorder %v57, 63
  %vm234 = vcmp.ge.s32.totalorder %v58, 63
  %vm235 = vcmp.ge.s32.totalorder %v59, 63
  %vm236 = vcmp.ge.s32.totalorder %v60, 63
  %vm237 = vcmp.ge.s32.totalorder %v61, 63
  %vm238 = vcmp.ge.s32.totalorder %v62, 63
  %vm239 = vcmp.ge.s32.totalorder %v63, 63
  %vm240 = vcmp.ge.s32.totalorder %v64, 63
  %vm241 = vcmp.ge.s32.totalorder %v65, 63
  %vm242 = vcmp.ge.s32.totalorder %v66, 63
  %vm243 = vcmp.ge.s32.totalorder %v67, 63
  %vm244 = vcmp.ge.s32.totalorder %v68, 63
  %vm245 = vcmp.ge.s32.totalorder %v69, 63
  %vm246 = vcmp.ge.s32.totalorder %v70, 63
  %vm247 = vcmp.lt.s32.totalorder %v55, 64
  %vm248 = vcmp.lt.s32.totalorder %v56, 64
  %vm249 = vcmp.lt.s32.totalorder %v57, 64
  %vm250 = vcmp.lt.s32.totalorder %v58, 64
  %vm251 = vcmp.lt.s32.totalorder %v59, 64
  %vm252 = vcmp.lt.s32.totalorder %v60, 64
  %vm253 = vcmp.lt.s32.totalorder %v61, 64
  %vm254 = vcmp.lt.s32.totalorder %v62, 64
  %vm255 = vcmp.lt.s32.totalorder %v63, 64
  %vm256 = vcmp.lt.s32.totalorder %v64, 64
  %vm257 = vcmp.lt.s32.totalorder %v65, 64
  %vm258 = vcmp.lt.s32.totalorder %v66, 64
  %vm259 = vcmp.lt.s32.totalorder %v67, 64
  %vm260 = vcmp.lt.s32.totalorder %v68, 64
  %vm261 = vcmp.lt.s32.totalorder %v69, 64
  %vm262 = vcmp.lt.s32.totalorder %v70, 64
  %vm263 = vmand %vm231, %vm247
  %vm264 = vmand %vm232, %vm248
  %vm265 = vmand %vm233, %vm249
  %vm266 = vmand %vm234, %vm250
  %vm267 = vmand %vm235, %vm251
  %vm268 = vmand %vm236, %vm252
  %vm269 = vmand %vm237, %vm253
  %vm270 = vmand %vm238, %vm254
  %vm271 = vmand %vm239, %vm255
  %vm272 = vmand %vm240, %vm256
  %vm273 = vmand %vm241, %vm257
  %vm274 = vmand %vm242, %vm258
  %vm275 = vmand %vm243, %vm259
  %vm276 = vmand %vm244, %vm260
  %vm277 = vmand %vm245, %vm261
  %vm278 = vmand %vm246, %vm262
  %vm279 = vcmp.ge.s32.totalorder %v55, 127
  %vm280 = vcmp.ge.s32.totalorder %v56, 127
  %vm281 = vcmp.ge.s32.totalorder %v57, 127
  %vm282 = vcmp.ge.s32.totalorder %v58, 127
  %vm283 = vcmp.ge.s32.totalorder %v59, 127
  %vm284 = vcmp.ge.s32.totalorder %v60, 127
  %vm285 = vcmp.ge.s32.totalorder %v61, 127
  %vm286 = vcmp.ge.s32.totalorder %v62, 127
  %vm287 = vcmp.ge.s32.totalorder %v63, 127
  %vm288 = vcmp.ge.s32.totalorder %v64, 127
  %vm289 = vcmp.ge.s32.totalorder %v65, 127
  %vm290 = vcmp.ge.s32.totalorder %v66, 127
  %vm291 = vcmp.ge.s32.totalorder %v67, 127
  %vm292 = vcmp.ge.s32.totalorder %v68, 127
  %vm293 = vcmp.ge.s32.totalorder %v69, 127
  %vm294 = vcmp.ge.s32.totalorder %v70, 127
  %vm295 = vcmp.lt.s32.totalorder %v55, 128
  %vm296 = vcmp.lt.s32.totalorder %v56, 128
  %vm297 = vcmp.lt.s32.totalorder %v57, 128
  %vm298 = vcmp.lt.s32.totalorder %v58, 128
  %vm299 = vcmp.lt.s32.totalorder %v59, 128
  %vm300 = vcmp.lt.s32.totalorder %v60, 128
  %vm301 = vcmp.lt.s32.totalorder %v61, 128
  %vm302 = vcmp.lt.s32.totalorder %v62, 128
  %vm303 = vcmp.lt.s32.totalorder %v63, 128
  %vm304 = vcmp.lt.s32.totalorder %v64, 128
  %vm305 = vcmp.lt.s32.totalorder %v65, 128
  %vm306 = vcmp.lt.s32.totalorder %v66, 128
  %vm307 = vcmp.lt.s32.totalorder %v67, 128
  %vm308 = vcmp.lt.s32.totalorder %v68, 128
  %vm309 = vcmp.lt.s32.totalorder %v69, 128
  %vm310 = vcmp.lt.s32.totalorder %v70, 128
  %vm311 = vmand %vm279, %vm295
  %vm312 = vmand %vm280, %vm296
  %vm313 = vmand %vm281, %vm297
  %vm314 = vmand %vm282, %vm298
  %vm315 = vmand %vm283, %vm299
  %vm316 = vmand %vm284, %vm300
  %vm317 = vmand %vm285, %vm301
  %vm318 = vmand %vm286, %vm302
  %vm319 = vmand %vm287, %vm303
  %vm320 = vmand %vm288, %vm304
  %vm321 = vmand %vm289, %vm305
  %vm322 = vmand %vm290, %vm306
  %vm323 = vmand %vm291, %vm307
  %vm324 = vmand %vm292, %vm308
  %vm325 = vmand %vm293, %vm309
  %vm326 = vmand %vm294, %vm310
  %vm327 = vmor %vm263, %vm311
  %vm328 = vmor %vm264, %vm312
  %vm329 = vmor %vm265, %vm313
  %vm330 = vmor %vm266, %vm314
  %vm331 = vmor %vm267, %vm315
  %vm332 = vmor %vm268, %vm316
  %vm333 = vmor %vm269, %vm317
  %vm334 = vmor %vm270, %vm318
  %vm335 = vmor %vm271, %vm319
  %vm336 = vmor %vm272, %vm320
  %vm337 = vmor %vm273, %vm321
  %vm338 = vmor %vm274, %vm322
  %vm339 = vmor %vm275, %vm323
  %vm340 = vmor %vm276, %vm324
  %vm341 = vmor %vm277, %vm325
  %vm342 = vmor %vm278, %vm326
  %vm343 = vmxor %vm327, 1
  %vm344 = vmxor %vm328, 1
  %vm345 = vmxor %vm329, 1
  %vm346 = vmxor %vm330, 1
  %vm347 = vmxor %vm331, 1
  %vm348 = vmxor %vm332, 1
  %vm349 = vmxor %vm333, 1
  %vm350 = vmxor %vm334, 1
  %vm351 = vmxor %vm335, 1
  %vm352 = vmxor %vm336, 1
  %vm353 = vmxor %vm337, 1
  %vm354 = vmxor %vm338, 1
  %vm355 = vmxor %vm339, 1
  %vm356 = vmxor %vm340, 1
  %vm357 = vmxor %vm341, 1
  %vm358 = vmxor %vm342, 1
  %v359 = vsel %vm343, 1, 0
  %v360 = vsel %vm344, 1, 0
  %v361 = vsel %vm345, 1, 0
  %v362 = vsel %vm346, 1, 0
  %v363 = vsel %vm347, 1, 0
  %v364 = vsel %vm348, 1, 0
  %v365 = vsel %vm349, 1, 0
  %v366 = vsel %vm350, 1, 0
  %v367 = vsel %vm351, 1, 0
  %v368 = vsel %vm352, 1, 0
  %v369 = vsel %vm353, 1, 0
  %v370 = vsel %vm354, 1, 0
  %v371 = vsel %vm355, 1, 0
  %v372 = vsel %vm356, 1, 0
  %v373 = vsel %vm357, 1, 0
  %v374 = vsel %vm358, 1, 0
  %v375 = vcvt.s32.f32 %v359
  %v376 = vcvt.s32.f32 %v360
  %v377 = vcvt.s32.f32 %v361
  %v378 = vcvt.s32.f32 %v362
  %v379 = vcvt.s32.f32 %v363
  %v380 = vcvt.s32.f32 %v364
  %v381 = vcvt.s32.f32 %v365
  %v382 = vcvt.s32.f32 %v366
  %v383 = vcvt.s32.f32 %v367
  %v384 = vcvt.s32.f32 %v368
  %v385 = vcvt.s32.f32 %v369
  %v386 = vcvt.s32.f32 %v370
  %v387 = vcvt.s32.f32 %v371
  %v388 = vcvt.s32.f32 %v372
  %v389 = vcvt.s32.f32 %v373
  %v390 = vcvt.s32.f32 %v374
  %v391 = vld [vmem:[%s1] sm:$0xff]
  %v392 = vld [vmem:[%s1 + $0x8] sm:$0xff]
  %v393 = vld [vmem:[%s1 + $0x10] sm:$0xff]
  %v394 = vld [vmem:[%s1 + $0x18] sm:$0xff]
  %v395 = vld [vmem:[%s1 + $0x20] sm:$0xff]
  %v396 = vld [vmem:[%s1 + $0x28] sm:$0xff]
  %v397 = vld [vmem:[%s1 + $0x30] sm:$0xff]
  %v398 = vld [vmem:[%s1 + $0x38] sm:$0xff]
  %v399 = vld [vmem:[%s1 + $0x40] sm:$0xff]
  %v400 = vld [vmem:[%s1 + $0x48] sm:$0xff]
  %v401 = vld [vmem:[%s1 + $0x50] sm:$0xff]
  %v402 = vld [vmem:[%s1 + $0x58] sm:$0xff]
  %v403 = vld [vmem:[%s1 + $0x60] sm:$0xff]
  %v404 = vld [vmem:[%s1 + $0x68] sm:$0xff]
  %v405 = vld [vmem:[%s1 + $0x70] sm:$0xff]
  %v406 = vld [vmem:[%s1 + $0x78] sm:$0xff]
  %407 = vmatpush.msra.mxu0 %v406
  %408 = vmatpush.msra.mxu0 %v405
  %409 = vmatpush.msra.mxu0 %v404
  %410 = vmatpush.msra.mxu0 %v403
  %411 = vmatpush.msra.mxu0 %v402
  %412 = vmatpush.msra.mxu0 %v401
  %413 = vmatpush.msra.mxu0 %v400
  %414 = vmatpush.msra.mxu0 %v399
  %415 = vmatpush.msra.mxu0 %v398
  %416 = vmatpush.msra.mxu0 %v397
  %417 = vmatpush.msra.mxu0 %v396
  %418 = vmatpush.msra.mxu0 %v395
  %419 = vmatpush.msra.mxu0 %v394
  %420 = vmatpush.msra.mxu0 %v393
  %421 = vmatpush.msra.mxu0 %v392
  %422 = vmatpush.msra.mxu0 %v391
  %423 = vmatmul.f32.gmra.mxu0 %v38
  %v424 = vpop.f32.mrf.mxu0
  %v425 = vadd.f32 0.0, %v424
  %426 = vmatmul.f32.gmra.mxu0 %v39
  %v427 = vpop.f32.mrf.mxu0
  %v428 = vadd.f32 0.0, %v427
  %429 = vmatmul.f32.gmra.mxu0 %v40
  %v430 = vpop.f32.mrf.mxu0
  %v431 = vadd.f32 0.0, %v430
  %432 = vmatmul.f32.gmra.mxu0 %v41
  %v433 = vpop.f32.mrf.mxu0
  %v434 = vadd.f32 0.0, %v433
  %435 = vmatmul.f32.gmra.mxu0 %v42
  %v436 = vpop.f32.mrf.mxu0
  %v437 = vadd.f32 0.0, %v436
  %438 = vmatmul.f32.gmra.mxu0 %v43
  %v439 = vpop.f32.mrf.mxu0
  %v440 = vadd.f32 0.0, %v439
  %441 = vmatmul.f32.gmra.mxu0 %v44
  %v442 = vpop.f32.mrf.mxu0
  %v443 = vadd.f32 0.0, %v442
  %444 = vmatmul.f32.gmra.mxu0 %v45
  %v445 = vpop.f32.mrf.mxu0
  %v446 = vadd.f32 0.0, %v445
  %447 = vmatmul.f32.gmra.mxu0 %v46
  %v448 = vpop.f32.mrf.mxu0
  %v449 = vadd.f32 0.0, %v448
  %450 = vmatmul.f32.gmra.mxu0 %v47
  %v451 = vpop.f32.mrf.mxu0
  %v452 = vadd.f32 0.0, %v451
  %453 = vmatmul.f32.gmra.mxu0 %v48
  %v454 = vpop.f32.mrf.mxu0
  %v455 = vadd.f32 0.0, %v454
  %456 = vmatmul.f32.gmra.mxu0 %v49
  %v457 = vpop.f32.mrf.mxu0
  %v458 = vadd.f32 0.0, %v457
  %459 = vmatmul.f32.gmra.mxu0 %v50
  %v460 = vpop.f32.mrf.mxu0
  %v461 = vadd.f32 0.0, %v460
  %462 = vmatmul.f32.gmra.mxu0 %v51
  %v463 = vpop.f32.mrf.mxu0
  %v464 = vadd.f32 0.0, %v463
  %465 = vmatmul.f32.gmra.mxu0 %v52
  %v466 = vpop.f32.mrf.mxu0
  %v467 = vadd.f32 0.0, %v466
  %468 = vmatmul.f32.gmra.mxu0 %v53
  %v469 = vpop.f32.mrf.mxu0
  %v470 = vadd.f32 0.0, %v469
  %471 = vdwg.mxu0
  %v472 = vrot.slane %v425, 7
  %v473 = vrot.slane %v428, 7
  %v474 = vrot.slane %v431, 7
  %v475 = vrot.slane %v434, 7
  %v476 = vrot.slane %v437, 7
  %v477 = vrot.slane %v440, 7
  %v478 = vrot.slane %v443, 7
  %v479 = vrot.slane %v446, 7
  %v480 = vrot.slane %v449, 7
  %v481 = vrot.slane %v452, 7
  %v482 = vrot.slane %v455, 7
  %v483 = vrot.slane %v458, 7
  %v484 = vrot.slane %v461, 7
  %v485 = vrot.slane %v464, 7
  %v486 = vrot.slane %v467, 7
  %v487 = vrot.slane %v470, 7
  %v488 = vsel %vm87, %v486, %v487
  %v489 = vsel %vm87, %v485, %v486
  %v490 = vsel %vm87, %v484, %v485
  %v491 = vsel %vm87, %v483, %v484
  %v492 = vsel %vm87, %v482, %v483
  %v493 = vsel %vm87, %v481, %v482
  %v494 = vsel %vm87, %v480, %v481
  %v495 = vsel %vm87, %v479, %v480
  %v496 = vsel %vm87, %v478, %v479
  %v497 = vsel %vm87, %v477, %v478
  %v498 = vsel %vm87, %v476, %v477
  %v499 = vsel %vm87, %v475, %v476
  %v500 = vsel %vm87, %v474, %v475
  %v501 = vsel %vm87, %v473, %v474
  %v502 = vsel %vm87, %v472, %v473
  %v503 = vsel %vm87, %v487, %v472
  %v504 = vmul.f32 %v503, %v215
  %v505 = vmul.f32 %v502, %v216
  %v506 = vmul.f32 %v501, %v217
  %v507 = vmul.f32 %v500, %v218
  %v508 = vmul.f32 %v499, %v219
  %v509 = vmul.f32 %v498, %v220
  %v510 = vmul.f32 %v497, %v221
  %v511 = vmul.f32 %v496, %v222
  %v512 = vmul.f32 %v495, %v223
  %v513 = vmul.f32 %v494, %v224
  %v514 = vmul.f32 %v493, %v225
  %v515 = vmul.f32 %v492, %v226
  %v516 = vmul.f32 %v491, %v227
  %v517 = vmul.f32 %v490, %v228
  %v518 = vmul.f32 %v489, %v229
  %v519 = vmul.f32 %v488, %v230
  %v520 = vadd.f32 %v504, 0.0
  %v521 = vadd.f32 %v505, 0.0
  %v522 = vadd.f32 %v506, 0.0
  %v523 = vadd.f32 %v507, 0.0
  %v524 = vadd.f32 %v508, 0.0
  %v525 = vadd.f32 %v509, 0.0
  %v526 = vadd.f32 %v510, 0.0
  %v527 = vadd.f32 %v511, 0.0
  %v528 = vadd.f32 %v512, 0.0
  %v529 = vadd.f32 %v513, 0.0
  %v530 = vadd.f32 %v514, 0.0
  %v531 = vadd.f32 %v515, 0.0
  %v532 = vadd.f32 %v516, 0.0
  %v533 = vadd.f32 %v517, 0.0
  %v534 = vadd.f32 %v518, 0.0
  %v535 = vadd.f32 %v519, 0.0
  %s536 = scalar_lea.vmem %s1, 128
  %v537 = vld [vmem:[%s536] sm:$0xff]
  %v538 = vld [vmem:[%s536 + $0x8] sm:$0xff]
  %v539 = vld [vmem:[%s536 + $0x10] sm:$0xff]
  %v540 = vld [vmem:[%s536 + $0x18] sm:$0xff]
  %v541 = vld [vmem:[%s536 + $0x20] sm:$0xff]
  %v542 = vld [vmem:[%s536 + $0x28] sm:$0xff]
  %v543 = vld [vmem:[%s536 + $0x30] sm:$0xff]
  %v544 = vld [vmem:[%s536 + $0x38] sm:$0xff]
  %v545 = vld [vmem:[%s536 + $0x40] sm:$0xff]
  %v546 = vld [vmem:[%s536 + $0x48] sm:$0xff]
  %v547 = vld [vmem:[%s536 + $0x50] sm:$0xff]
  %v548 = vld [vmem:[%s536 + $0x58] sm:$0xff]
  %v549 = vld [vmem:[%s536 + $0x60] sm:$0xff]
  %v550 = vld [vmem:[%s536 + $0x68] sm:$0xff]
  %v551 = vld [vmem:[%s536 + $0x70] sm:$0xff]
  %v552 = vld [vmem:[%s536 + $0x78] sm:$0xff]
  %553 = vmatpush.msra.mxu0 %v552
  %554 = vmatpush.msra.mxu0 %v551
  %555 = vmatpush.msra.mxu0 %v550
  %556 = vmatpush.msra.mxu0 %v549
  %557 = vmatpush.msra.mxu0 %v548
  %558 = vmatpush.msra.mxu0 %v547
  %559 = vmatpush.msra.mxu0 %v546
  %560 = vmatpush.msra.mxu0 %v545
  %561 = vmatpush.msra.mxu0 %v544
  %562 = vmatpush.msra.mxu0 %v543
  %563 = vmatpush.msra.mxu0 %v542
  %564 = vmatpush.msra.mxu0 %v541
  %565 = vmatpush.msra.mxu0 %v540
  %566 = vmatpush.msra.mxu0 %v539
  %567 = vmatpush.msra.mxu0 %v538
  %568 = vmatpush.msra.mxu0 %v537
  %569 = vmatmul.f32.gmra.mxu0 %v38
  %v570 = vpop.f32.mrf.mxu0
  %v571 = vadd.f32 0.0, %v570
  %572 = vmatmul.f32.gmra.mxu0 %v39
  %v573 = vpop.f32.mrf.mxu0
  %v574 = vadd.f32 0.0, %v573
  %575 = vmatmul.f32.gmra.mxu0 %v40
  %v576 = vpop.f32.mrf.mxu0
  %v577 = vadd.f32 0.0, %v576
  %578 = vmatmul.f32.gmra.mxu0 %v41
  %v579 = vpop.f32.mrf.mxu0
  %v580 = vadd.f32 0.0, %v579
  %581 = vmatmul.f32.gmra.mxu0 %v42
  %v582 = vpop.f32.mrf.mxu0
  %v583 = vadd.f32 0.0, %v582
  %584 = vmatmul.f32.gmra.mxu0 %v43
  %v585 = vpop.f32.mrf.mxu0
  %v586 = vadd.f32 0.0, %v585
  %587 = vmatmul.f32.gmra.mxu0 %v44
  %v588 = vpop.f32.mrf.mxu0
  %v589 = vadd.f32 0.0, %v588
  %590 = vmatmul.f32.gmra.mxu0 %v45
  %v591 = vpop.f32.mrf.mxu0
  %v592 = vadd.f32 0.0, %v591
  %593 = vmatmul.f32.gmra.mxu0 %v46
  %v594 = vpop.f32.mrf.mxu0
  %v595 = vadd.f32 0.0, %v594
  %596 = vmatmul.f32.gmra.mxu0 %v47
  %v597 = vpop.f32.mrf.mxu0
  %v598 = vadd.f32 0.0, %v597
  %599 = vmatmul.f32.gmra.mxu0 %v48
  %v600 = vpop.f32.mrf.mxu0
  %v601 = vadd.f32 0.0, %v600
  %602 = vmatmul.f32.gmra.mxu0 %v49
  %v603 = vpop.f32.mrf.mxu0
  %v604 = vadd.f32 0.0, %v603
  %605 = vmatmul.f32.gmra.mxu0 %v50
  %v606 = vpop.f32.mrf.mxu0
  %v607 = vadd.f32 0.0, %v606
  %608 = vmatmul.f32.gmra.mxu0 %v51
  %v609 = vpop.f32.mrf.mxu0
  %v610 = vadd.f32 0.0, %v609
  %611 = vmatmul.f32.gmra.mxu0 %v52
  %v612 = vpop.f32.mrf.mxu0
  %v613 = vadd.f32 0.0, %v612
  %614 = vmatmul.f32.gmra.mxu0 %v53
  %v615 = vpop.f32.mrf.mxu0
  %v616 = vadd.f32 0.0, %v615
  %617 = vdwg.mxu0
  %v618 = vadd.f32 %v520, %v571
  %v619 = vadd.f32 %v521, %v574
  %v620 = vadd.f32 %v522, %v577
  %v621 = vadd.f32 %v523, %v580
  %v622 = vadd.f32 %v524, %v583
  %v623 = vadd.f32 %v525, %v586
  %v624 = vadd.f32 %v526, %v589
  %v625 = vadd.f32 %v527, %v592
  %v626 = vadd.f32 %v528, %v595
  %v627 = vadd.f32 %v529, %v598
  %v628 = vadd.f32 %v530, %v601
  %v629 = vadd.f32 %v531, %v604
  %v630 = vadd.f32 %v532, %v607
  %v631 = vadd.f32 %v533, %v610
  %v632 = vadd.f32 %v534, %v613
  %v633 = vadd.f32 %v535, %v616
  %s634 = scalar_lea.vmem %s1, 256
  %v635 = vld [vmem:[%s634] sm:$0xff]
  %v636 = vld [vmem:[%s634 + $0x8] sm:$0xff]
  %v637 = vld [vmem:[%s634 + $0x10] sm:$0xff]
  %v638 = vld [vmem:[%s634 + $0x18] sm:$0xff]
  %v639 = vld [vmem:[%s634 + $0x20] sm:$0xff]
  %v640 = vld [vmem:[%s634 + $0x28] sm:$0xff]
  %v641 = vld [vmem:[%s634 + $0x30] sm:$0xff]
  %v642 = vld [vmem:[%s634 + $0x38] sm:$0xff]
  %v643 = vld [vmem:[%s634 + $0x40] sm:$0xff]
  %v644 = vld [vmem:[%s634 + $0x48] sm:$0xff]
  %v645 = vld [vmem:[%s634 + $0x50] sm:$0xff]
  %v646 = vld [vmem:[%s634 + $0x58] sm:$0xff]
  %v647 = vld [vmem:[%s634 + $0x60] sm:$0xff]
  %v648 = vld [vmem:[%s634 + $0x68] sm:$0xff]
  %v649 = vld [vmem:[%s634 + $0x70] sm:$0xff]
  %v650 = vld [vmem:[%s634 + $0x78] sm:$0xff]
  %651 = vmatpush.msra.mxu0 %v650
  %652 = vmatpush.msra.mxu0 %v649
  %653 = vmatpush.msra.mxu0 %v648
  %654 = vmatpush.msra.mxu0 %v647
  %655 = vmatpush.msra.mxu0 %v646
  %656 = vmatpush.msra.mxu0 %v645
  %657 = vmatpush.msra.mxu0 %v644
  %658 = vmatpush.msra.mxu0 %v643
  %659 = vmatpush.msra.mxu0 %v642
  %660 = vmatpush.msra.mxu0 %v641
  %661 = vmatpush.msra.mxu0 %v640
  %662 = vmatpush.msra.mxu0 %v639
  %663 = vmatpush.msra.mxu0 %v638
  %664 = vmatpush.msra.mxu0 %v637
  %665 = vmatpush.msra.mxu0 %v636
  %666 = vmatpush.msra.mxu0 %v635
  %667 = vmatmul.f32.gmra.mxu0 %v38
  %v668 = vpop.f32.mrf.mxu0
  %v669 = vadd.f32 0.0, %v668
  %670 = vmatmul.f32.gmra.mxu0 %v39
  %v671 = vpop.f32.mrf.mxu0
  %v672 = vadd.f32 0.0, %v671
  %673 = vmatmul.f32.gmra.mxu0 %v40
  %v674 = vpop.f32.mrf.mxu0
  %v675 = vadd.f32 0.0, %v674
  %676 = vmatmul.f32.gmra.mxu0 %v41
  %v677 = vpop.f32.mrf.mxu0
  %v678 = vadd.f32 0.0, %v677
  %679 = vmatmul.f32.gmra.mxu0 %v42
  %v680 = vpop.f32.mrf.mxu0
  %v681 = vadd.f32 0.0, %v680
  %682 = vmatmul.f32.gmra.mxu0 %v43
  %v683 = vpop.f32.mrf.mxu0
  %v684 = vadd.f32 0.0, %v683
  %685 = vmatmul.f32.gmra.mxu0 %v44
  %v686 = vpop.f32.mrf.mxu0
  %v687 = vadd.f32 0.0, %v686
  %688 = vmatmul.f32.gmra.mxu0 %v45
  %v689 = vpop.f32.mrf.mxu0
  %v690 = vadd.f32 0.0, %v689
  %691 = vmatmul.f32.gmra.mxu0 %v46
  %v692 = vpop.f32.mrf.mxu0
  %v693 = vadd.f32 0.0, %v692
  %694 = vmatmul.f32.gmra.mxu0 %v47
  %v695 = vpop.f32.mrf.mxu0
  %v696 = vadd.f32 0.0, %v695
  %697 = vmatmul.f32.gmra.mxu0 %v48
  %v698 = vpop.f32.mrf.mxu0
  %v699 = vadd.f32 0.0, %v698
  %700 = vmatmul.f32.gmra.mxu0 %v49
  %v701 = vpop.f32.mrf.mxu0
  %v702 = vadd.f32 0.0, %v701
  %703 = vmatmul.f32.gmra.mxu0 %v50
  %v704 = vpop.f32.mrf.mxu0
  %v705 = vadd.f32 0.0, %v704
  %706 = vmatmul.f32.gmra.mxu0 %v51
  %v707 = vpop.f32.mrf.mxu0
  %v708 = vadd.f32 0.0, %v707
  %709 = vmatmul.f32.gmra.mxu0 %v52
  %v710 = vpop.f32.mrf.mxu0
  %v711 = vadd.f32 0.0, %v710
  %712 = vmatmul.f32.gmra.mxu0 %v53
  %v713 = vpop.f32.mrf.mxu0
  %v714 = vadd.f32 0.0, %v713
  %715 = vdwg.mxu0
  %v716 = vrot.slane %v669, 1
  %v717 = vrot.slane %v672, 1
  %v718 = vrot.slane %v675, 1
  %v719 = vrot.slane %v678, 1
  %v720 = vrot.slane %v681, 1
  %v721 = vrot.slane %v684, 1
  %v722 = vrot.slane %v687, 1
  %v723 = vrot.slane %v690, 1
  %v724 = vrot.slane %v693, 1
  %v725 = vrot.slane %v696, 1
  %v726 = vrot.slane %v699, 1
  %v727 = vrot.slane %v702, 1
  %v728 = vrot.slane %v705, 1
  %v729 = vrot.slane %v708, 1
  %v730 = vrot.slane %v711, 1
  %v731 = vrot.slane %v714, 1
  %vm732 = vcmp.lt.s32.totalorder %v55, 7
  %v733 = vsel %vm732, %v730, %v731
  %v734 = vsel %vm732, %v729, %v730
  %v735 = vsel %vm732, %v728, %v729
  %v736 = vsel %vm732, %v727, %v728
  %v737 = vsel %vm732, %v726, %v727
  %v738 = vsel %vm732, %v725, %v726
  %v739 = vsel %vm732, %v724, %v725
  %v740 = vsel %vm732, %v723, %v724
  %v741 = vsel %vm732, %v722, %v723
  %v742 = vsel %vm732, %v721, %v722
  %v743 = vsel %vm732, %v720, %v721
  %v744 = vsel %vm732, %v719, %v720
  %v745 = vsel %vm732, %v718, %v719
  %v746 = vsel %vm732, %v717, %v718
  %v747 = vsel %vm732, %v716, %v717
  %v748 = vsel %vm732, %v731, %v716
  %v749 = vmul.f32 %v747, %v375
  %v750 = vmul.f32 %v746, %v376
  %v751 = vmul.f32 %v745, %v377
  %v752 = vmul.f32 %v744, %v378
  %v753 = vmul.f32 %v743, %v379
  %v754 = vmul.f32 %v742, %v380
  %v755 = vmul.f32 %v741, %v381
  %v756 = vmul.f32 %v740, %v382
  %v757 = vmul.f32 %v739, %v383
  %v758 = vmul.f32 %v738, %v384
  %v759 = vmul.f32 %v737, %v385
  %v760 = vmul.f32 %v736, %v386
  %v761 = vmul.f32 %v735, %v387
  %v762 = vmul.f32 %v734, %v388
  %v763 = vmul.f32 %v733, %v389
  %v764 = vmul.f32 %v748, %v390
  %v765 = vadd.f32 %v618, %v749
  %v766 = vadd.f32 %v619, %v750
  %v767 = vadd.f32 %v620, %v751
  %v768 = vadd.f32 %v621, %v752
  %v769 = vadd.f32 %v622, %v753
  %v770 = vadd.f32 %v623, %v754
  %v771 = vadd.f32 %v624, %v755
  %v772 = vadd.f32 %v625, %v756
  %v773 = vadd.f32 %v626, %v757
  %v774 = vadd.f32 %v627, %v758
  %v775 = vadd.f32 %v628, %v759
  %v776 = vadd.f32 %v629, %v760
  %v777 = vadd.f32 %v630, %v761
  %v778 = vadd.f32 %v631, %v762
  %v779 = vadd.f32 %v632, %v763
  %v780 = vadd.f32 %v633, %v764
  %v781 = vld [vmem:[%s2] sm:$0x1]
  %v783 = vperm.slane %v781, 0
  %v785 = vadd.f32 %v765, %v783
  %v786 = vadd.f32 %v766, %v783
  %v787 = vadd.f32 %v767, %v783
  %v788 = vadd.f32 %v768, %v783
  %v789 = vadd.f32 %v769, %v783
  %v790 = vadd.f32 %v770, %v783
  %v791 = vadd.f32 %v771, %v783
  %v792 = vadd.f32 %v772, %v783
  %v793 = vadd.f32 %v773, %v783
  %v794 = vadd.f32 %v774, %v783
  %v795 = vadd.f32 %v775, %v783
  %v796 = vadd.f32 %v776, %v783
  %v797 = vadd.f32 %v777, %v783
  %v798 = vadd.f32 %v778, %v783
  %v799 = vadd.f32 %v779, %v783
  %v800 = vadd.f32 %v780, %v783
  %v801 = vld [vmem:[%s3] sm:$0x1]
  %v803 = vperm.slane %v801, 0
  %v805 = vmul.f32 %v785, %v803
  %v806 = vmul.f32 %v786, %v803
  %v807 = vmul.f32 %v787, %v803
  %v808 = vmul.f32 %v788, %v803
  %v809 = vmul.f32 %v789, %v803
  %v810 = vmul.f32 %v790, %v803
  %v811 = vmul.f32 %v791, %v803
  %v812 = vmul.f32 %v792, %v803
  %v813 = vmul.f32 %v793, %v803
  %v814 = vmul.f32 %v794, %v803
  %v815 = vmul.f32 %v795, %v803
  %v816 = vmul.f32 %v796, %v803
  %v817 = vmul.f32 %v797, %v803
  %v818 = vmul.f32 %v798, %v803
  %v819 = vmul.f32 %v799, %v803
  %v820 = vmul.f32 %v800, %v803
  %v821 = vld [vmem:[%s4] sm:$0x1]
  %v823 = vperm.slane %v821, 0
  %v825 = vadd.f32 %v805, %v823
  %v826 = vadd.f32 %v806, %v823
  %v827 = vadd.f32 %v807, %v823
  %v828 = vadd.f32 %v808, %v823
  %v829 = vadd.f32 %v809, %v823
  %v830 = vadd.f32 %v810, %v823
  %v831 = vadd.f32 %v811, %v823
  %v832 = vadd.f32 %v812, %v823
  %v833 = vadd.f32 %v813, %v823
  %v834 = vadd.f32 %v814, %v823
  %v835 = vadd.f32 %v815, %v823
  %v836 = vadd.f32 %v816, %v823
  %v837 = vadd.f32 %v817, %v823
  %v838 = vadd.f32 %v818, %v823
  %v839 = vadd.f32 %v819, %v823
  %v840 = vadd.f32 %v820, %v823
  %v841 = vmax.f32 %v825, 0.0
  %v842 = vmax.f32 %v826, 0.0
  %v843 = vmax.f32 %v827, 0.0
  %v844 = vmax.f32 %v828, 0.0
  %v845 = vmax.f32 %v829, 0.0
  %v846 = vmax.f32 %v830, 0.0
  %v847 = vmax.f32 %v831, 0.0
  %v848 = vmax.f32 %v832, 0.0
  %v849 = vmax.f32 %v833, 0.0
  %v850 = vmax.f32 %v834, 0.0
  %v851 = vmax.f32 %v835, 0.0
  %v852 = vmax.f32 %v836, 0.0
  %v853 = vmax.f32 %v837, 0.0
  %v854 = vmax.f32 %v838, 0.0
  %v855 = vmax.f32 %v839, 0.0
  %v856 = vmax.f32 %v840, 0.0
  %v857 = vld [vmem:[%s5] sm:$0xff]
  %v858 = vld [vmem:[%s5 + $0x8] sm:$0xff]
  %v859 = vld [vmem:[%s5 + $0x10] sm:$0xff]
  %v860 = vld [vmem:[%s5 + $0x18] sm:$0xff]
  %v861 = vld [vmem:[%s5 + $0x20] sm:$0xff]
  %v862 = vld [vmem:[%s5 + $0x28] sm:$0xff]
  %v863 = vld [vmem:[%s5 + $0x30] sm:$0xff]
  %v864 = vld [vmem:[%s5 + $0x38] sm:$0xff]
  %v865 = vld [vmem:[%s5 + $0x40] sm:$0xff]
  %v866 = vld [vmem:[%s5 + $0x48] sm:$0xff]
  %v867 = vld [vmem:[%s5 + $0x50] sm:$0xff]
  %v868 = vld [vmem:[%s5 + $0x58] sm:$0xff]
  %v869 = vld [vmem:[%s5 + $0x60] sm:$0xff]
  %v870 = vld [vmem:[%s5 + $0x68] sm:$0xff]
  %v871 = vld [vmem:[%s5 + $0x70] sm:$0xff]
  %v872 = vld [vmem:[%s5 + $0x78] sm:$0xff]
  %873 = vmatpush.msra.mxu0 %v872
  %874 = vmatpush.msra.mxu0 %v871
  %875 = vmatpush.msra.mxu0 %v870
  %876 = vmatpush.msra.mxu0 %v869
  %877 = vmatpush.msra.mxu0 %v868
  %878 = vmatpush.msra.mxu0 %v867
  %879 = vmatpush.msra.mxu0 %v866
  %880 = vmatpush.msra.mxu0 %v865
  %881 = vmatpush.msra.mxu0 %v864
  %882 = vmatpush.msra.mxu0 %v863
  %883 = vmatpush.msra.mxu0 %v862
  %884 = vmatpush.msra.mxu0 %v861
  %885 = vmatpush.msra.mxu0 %v860
  %886 = vmatpush.msra.mxu0 %v859
  %887 = vmatpush.msra.mxu0 %v858
  %888 = vmatpush.msra.mxu0 %v857
  %889 = vmatmul.f32.gmra.mxu0 %v841
  %v890 = vpop.f32.mrf.mxu0
  %v891 = vadd.f32 0.0, %v890
  %892 = vmatmul.f32.gmra.mxu0 %v842
  %v893 = vpop.f32.mrf.mxu0
  %v894 = vadd.f32 0.0, %v893
  %895 = vmatmul.f32.gmra.mxu0 %v843
  %v896 = vpop.f32.mrf.mxu0
  %v897 = vadd.f32 0.0, %v896
  %898 = vmatmul.f32.gmra.mxu0 %v844
  %v899 = vpop.f32.mrf.mxu0
  %v900 = vadd.f32 0.0, %v899
  %901 = vmatmul.f32.gmra.mxu0 %v845
  %v902 = vpop.f32.mrf.mxu0
  %v903 = vadd.f32 0.0, %v902
  %904 = vmatmul.f32.gmra.mxu0 %v846
  %v905 = vpop.f32.mrf.mxu0
  %v906 = vadd.f32 0.0, %v905
  %907 = vmatmul.f32.gmra.mxu0 %v847
  %v908 = vpop.f32.mrf.mxu0
  %v909 = vadd.f32 0.0, %v908
  %910 = vmatmul.f32.gmra.mxu0 %v848
  %v911 = vpop.f32.mrf.mxu0
  %v912 = vadd.f32 0.0, %v911
  %913 = vmatmul.f32.gmra.mxu0 %v849
  %v914 = vpop.f32.mrf.mxu0
  %v915 = vadd.f32 0.0, %v914
  %916 = vmatmul.f32.gmra.mxu0 %v850
  %v917 = vpop.f32.mrf.mxu0
  %v918 = vadd.f32 0.0, %v917
  %919 = vmatmul.f32.gmra.mxu0 %v851
  %v920 = vpop.f32.mrf.mxu0
  %v921 = vadd.f32 0.0, %v920
  %922 = vmatmul.f32.gmra.mxu0 %v852
  %v923 = vpop.f32.mrf.mxu0
  %v924 = vadd.f32 0.0, %v923
  %925 = vmatmul.f32.gmra.mxu0 %v853
  %v926 = vpop.f32.mrf.mxu0
  %v927 = vadd.f32 0.0, %v926
  %928 = vmatmul.f32.gmra.mxu0 %v854
  %v929 = vpop.f32.mrf.mxu0
  %v930 = vadd.f32 0.0, %v929
  %931 = vmatmul.f32.gmra.mxu0 %v855
  %v932 = vpop.f32.mrf.mxu0
  %v933 = vadd.f32 0.0, %v932
  %934 = vmatmul.f32.gmra.mxu0 %v856
  %v935 = vpop.f32.mrf.mxu0
  %v936 = vadd.f32 0.0, %v935
  %937 = vdwg.mxu0
  %v938 = vrot.slane %v891, 7
  %v939 = vrot.slane %v894, 7
  %v940 = vrot.slane %v897, 7
  %v941 = vrot.slane %v900, 7
  %v942 = vrot.slane %v903, 7
  %v943 = vrot.slane %v906, 7
  %v944 = vrot.slane %v909, 7
  %v945 = vrot.slane %v912, 7
  %v946 = vrot.slane %v915, 7
  %v947 = vrot.slane %v918, 7
  %v948 = vrot.slane %v921, 7
  %v949 = vrot.slane %v924, 7
  %v950 = vrot.slane %v927, 7
  %v951 = vrot.slane %v930, 7
  %v952 = vrot.slane %v933, 7
  %v953 = vrot.slane %v936, 7
  %v954 = vsel %vm87, %v952, %v953
  %v955 = vsel %vm87, %v951, %v952
  %v956 = vsel %vm87, %v950, %v951
  %v957 = vsel %vm87, %v949, %v950
  %v958 = vsel %vm87, %v948, %v949
  %v959 = vsel %vm87, %v947, %v948
  %v960 = vsel %vm87, %v946, %v947
  %v961 = vsel %vm87, %v945, %v946
  %v962 = vsel %vm87, %v944, %v945
  %v963 = vsel %vm87, %v943, %v944
  %v964 = vsel %vm87, %v942, %v943
  %v965 = vsel %vm87, %v941, %v942
  %v966 = vsel %vm87, %v940, %v941
  %v967 = vsel %vm87, %v939, %v940
  %v968 = vsel %vm87, %v938, %v939
  %v969 = vsel %vm87, %v953, %v938
  %v970 = vmul.f32 %v969, %v215
  %v971 = vmul.f32 %v968, %v216
  %v972 = vmul.f32 %v967, %v217
  %v973 = vmul.f32 %v966, %v218
  %v974 = vmul.f32 %v965, %v219
  %v975 = vmul.f32 %v964, %v220
  %v976 = vmul.f32 %v963, %v221
  %v977 = vmul.f32 %v962, %v222
  %v978 = vmul.f32 %v961, %v223
  %v979 = vmul.f32 %v960, %v224
  %v980 = vmul.f32 %v959, %v225
  %v981 = vmul.f32 %v958, %v226
  %v982 = vmul.f32 %v957, %v227
  %v983 = vmul.f32 %v956, %v228
  %v984 = vmul.f32 %v955, %v229
  %v985 = vmul.f32 %v954, %v230
  %v986 = vadd.f32 %v970, 0.0
  %v987 = vadd.f32 %v971, 0.0
  %v988 = vadd.f32 %v972, 0.0
  %v989 = vadd.f32 %v973, 0.0
  %v990 = vadd.f32 %v974, 0.0
  %v991 = vadd.f32 %v975, 0.0
  %v992 = vadd.f32 %v976, 0.0
  %v993 = vadd.f32 %v977, 0.0
  %v994 = vadd.f32 %v978, 0.0
  %v995 = vadd.f32 %v979, 0.0
  %v996 = vadd.f32 %v980, 0.0
  %v997 = vadd.f32 %v981, 0.0
  %v998 = vadd.f32 %v982, 0.0
  %v999 = vadd.f32 %v983, 0.0
  %v1000 = vadd.f32 %v984, 0.0
  %v1001 = vadd.f32 %v985, 0.0
  %s1002 = scalar_lea.vmem %s5, 128
  %v1003 = vld [vmem:[%s1002] sm:$0xff]
  %v1004 = vld [vmem:[%s1002 + $0x8] sm:$0xff]
  %v1005 = vld [vmem:[%s1002 + $0x10] sm:$0xff]
  %v1006 = vld [vmem:[%s1002 + $0x18] sm:$0xff]
  %v1007 = vld [vmem:[%s1002 + $0x20] sm:$0xff]
  %v1008 = vld [vmem:[%s1002 + $0x28] sm:$0xff]
  %v1009 = vld [vmem:[%s1002 + $0x30] sm:$0xff]
  %v1010 = vld [vmem:[%s1002 + $0x38] sm:$0xff]
  %v1011 = vld [vmem:[%s1002 + $0x40] sm:$0xff]
  %v1012 = vld [vmem:[%s1002 + $0x48] sm:$0xff]
  %v1013 = vld [vmem:[%s1002 + $0x50] sm:$0xff]
  %v1014 = vld [vmem:[%s1002 + $0x58] sm:$0xff]
  %v1015 = vld [vmem:[%s1002 + $0x60] sm:$0xff]
  %v1016 = vld [vmem:[%s1002 + $0x68] sm:$0xff]
  %v1017 = vld [vmem:[%s1002 + $0x70] sm:$0xff]
  %v1018 = vld [vmem:[%s1002 + $0x78] sm:$0xff]
  %1019 = vmatpush.msra.mxu0 %v1018
  %1020 = vmatpush.msra.mxu0 %v1017
  %1021 = vmatpush.msra.mxu0 %v1016
  %1022 = vmatpush.msra.mxu0 %v1015
  %1023 = vmatpush.msra.mxu0 %v1014
  %1024 = vmatpush.msra.mxu0 %v1013
  %1025 = vmatpush.msra.mxu0 %v1012
  %1026 = vmatpush.msra.mxu0 %v1011
  %1027 = vmatpush.msra.mxu0 %v1010
  %1028 = vmatpush.msra.mxu0 %v1009
  %1029 = vmatpush.msra.mxu0 %v1008
  %1030 = vmatpush.msra.mxu0 %v1007
  %1031 = vmatpush.msra.mxu0 %v1006
  %1032 = vmatpush.msra.mxu0 %v1005
  %1033 = vmatpush.msra.mxu0 %v1004
  %1034 = vmatpush.msra.mxu0 %v1003
  %1035 = vmatmul.f32.gmra.mxu0 %v841
  %v1036 = vpop.f32.mrf.mxu0
  %v1037 = vadd.f32 0.0, %v1036
  %1038 = vmatmul.f32.gmra.mxu0 %v842
  %v1039 = vpop.f32.mrf.mxu0
  %v1040 = vadd.f32 0.0, %v1039
  %1041 = vmatmul.f32.gmra.mxu0 %v843
  %v1042 = vpop.f32.mrf.mxu0
  %v1043 = vadd.f32 0.0, %v1042
  %1044 = vmatmul.f32.gmra.mxu0 %v844
  %v1045 = vpop.f32.mrf.mxu0
  %v1046 = vadd.f32 0.0, %v1045
  %1047 = vmatmul.f32.gmra.mxu0 %v845
  %v1048 = vpop.f32.mrf.mxu0
  %v1049 = vadd.f32 0.0, %v1048
  %1050 = vmatmul.f32.gmra.mxu0 %v846
  %v1051 = vpop.f32.mrf.mxu0
  %v1052 = vadd.f32 0.0, %v1051
  %1053 = vmatmul.f32.gmra.mxu0 %v847
  %v1054 = vpop.f32.mrf.mxu0
  %v1055 = vadd.f32 0.0, %v1054
  %1056 = vmatmul.f32.gmra.mxu0 %v848
  %v1057 = vpop.f32.mrf.mxu0
  %v1058 = vadd.f32 0.0, %v1057
  %1059 = vmatmul.f32.gmra.mxu0 %v849
  %v1060 = vpop.f32.mrf.mxu0
  %v1061 = vadd.f32 0.0, %v1060
  %1062 = vmatmul.f32.gmra.mxu0 %v850
  %v1063 = vpop.f32.mrf.mxu0
  %v1064 = vadd.f32 0.0, %v1063
  %1065 = vmatmul.f32.gmra.mxu0 %v851
  %v1066 = vpop.f32.mrf.mxu0
  %v1067 = vadd.f32 0.0, %v1066
  %1068 = vmatmul.f32.gmra.mxu0 %v852
  %v1069 = vpop.f32.mrf.mxu0
  %v1070 = vadd.f32 0.0, %v1069
  %1071 = vmatmul.f32.gmra.mxu0 %v853
  %v1072 = vpop.f32.mrf.mxu0
  %v1073 = vadd.f32 0.0, %v1072
  %1074 = vmatmul.f32.gmra.mxu0 %v854
  %v1075 = vpop.f32.mrf.mxu0
  %v1076 = vadd.f32 0.0, %v1075
  %1077 = vmatmul.f32.gmra.mxu0 %v855
  %v1078 = vpop.f32.mrf.mxu0
  %v1079 = vadd.f32 0.0, %v1078
  %1080 = vmatmul.f32.gmra.mxu0 %v856
  %v1081 = vpop.f32.mrf.mxu0
  %v1082 = vadd.f32 0.0, %v1081
  %1083 = vdwg.mxu0
  %v1084 = vadd.f32 %v986, %v1037
  %v1085 = vadd.f32 %v987, %v1040
  %v1086 = vadd.f32 %v988, %v1043
  %v1087 = vadd.f32 %v989, %v1046
  %v1088 = vadd.f32 %v990, %v1049
  %v1089 = vadd.f32 %v991, %v1052
  %v1090 = vadd.f32 %v992, %v1055
  %v1091 = vadd.f32 %v993, %v1058
  %v1092 = vadd.f32 %v994, %v1061
  %v1093 = vadd.f32 %v995, %v1064
  %v1094 = vadd.f32 %v996, %v1067
  %v1095 = vadd.f32 %v997, %v1070
  %v1096 = vadd.f32 %v998, %v1073
  %v1097 = vadd.f32 %v999, %v1076
  %v1098 = vadd.f32 %v1000, %v1079
  %v1099 = vadd.f32 %v1001, %v1082
  %s1100 = scalar_lea.vmem %s5, 256
  %v1101 = vld [vmem:[%s1100] sm:$0xff]
  %v1102 = vld [vmem:[%s1100 + $0x8] sm:$0xff]
  %v1103 = vld [vmem:[%s1100 + $0x10] sm:$0xff]
  %v1104 = vld [vmem:[%s1100 + $0x18] sm:$0xff]
  %v1105 = vld [vmem:[%s1100 + $0x20] sm:$0xff]
  %v1106 = vld [vmem:[%s1100 + $0x28] sm:$0xff]
  %v1107 = vld [vmem:[%s1100 + $0x30] sm:$0xff]
  %v1108 = vld [vmem:[%s1100 + $0x38] sm:$0xff]
  %v1109 = vld [vmem:[%s1100 + $0x40] sm:$0xff]
  %v1110 = vld [vmem:[%s1100 + $0x48] sm:$0xff]
  %v1111 = vld [vmem:[%s1100 + $0x50] sm:$0xff]
  %v1112 = vld [vmem:[%s1100 + $0x58] sm:$0xff]
  %v1113 = vld [vmem:[%s1100 + $0x60] sm:$0xff]
  %v1114 = vld [vmem:[%s1100 + $0x68] sm:$0xff]
  %v1115 = vld [vmem:[%s1100 + $0x70] sm:$0xff]
  %v1116 = vld [vmem:[%s1100 + $0x78] sm:$0xff]
  %1117 = vmatpush.msra.mxu0 %v1116
  %1118 = vmatpush.msra.mxu0 %v1115
  %1119 = vmatpush.msra.mxu0 %v1114
  %1120 = vmatpush.msra.mxu0 %v1113
  %1121 = vmatpush.msra.mxu0 %v1112
  %1122 = vmatpush.msra.mxu0 %v1111
  %1123 = vmatpush.msra.mxu0 %v1110
  %1124 = vmatpush.msra.mxu0 %v1109
  %1125 = vmatpush.msra.mxu0 %v1108
  %1126 = vmatpush.msra.mxu0 %v1107
  %1127 = vmatpush.msra.mxu0 %v1106
  %1128 = vmatpush.msra.mxu0 %v1105
  %1129 = vmatpush.msra.mxu0 %v1104
  %1130 = vmatpush.msra.mxu0 %v1103
  %1131 = vmatpush.msra.mxu0 %v1102
  %1132 = vmatpush.msra.mxu0 %v1101
  %1133 = vmatmul.f32.gmra.mxu0 %v841
  %v1134 = vpop.f32.mrf.mxu0
  %v1135 = vadd.f32 0.0, %v1134
  %1136 = vmatmul.f32.gmra.mxu0 %v842
  %v1137 = vpop.f32.mrf.mxu0
  %v1138 = vadd.f32 0.0, %v1137
  %1139 = vmatmul.f32.gmra.mxu0 %v843
  %v1140 = vpop.f32.mrf.mxu0
  %v1141 = vadd.f32 0.0, %v1140
  %1142 = vmatmul.f32.gmra.mxu0 %v844
  %v1143 = vpop.f32.mrf.mxu0
  %v1144 = vadd.f32 0.0, %v1143
  %1145 = vmatmul.f32.gmra.mxu0 %v845
  %v1146 = vpop.f32.mrf.mxu0
  %v1147 = vadd.f32 0.0, %v1146
  %1148 = vmatmul.f32.gmra.mxu0 %v846
  %v1149 = vpop.f32.mrf.mxu0
  %v1150 = vadd.f32 0.0, %v1149
  %1151 = vmatmul.f32.gmra.mxu0 %v847
  %v1152 = vpop.f32.mrf.mxu0
  %v1153 = vadd.f32 0.0, %v1152
  %1154 = vmatmul.f32.gmra.mxu0 %v848
  %v1155 = vpop.f32.mrf.mxu0
  %v1156 = vadd.f32 0.0, %v1155
  %1157 = vmatmul.f32.gmra.mxu0 %v849
  %v1158 = vpop.f32.mrf.mxu0
  %v1159 = vadd.f32 0.0, %v1158
  %1160 = vmatmul.f32.gmra.mxu0 %v850
  %v1161 = vpop.f32.mrf.mxu0
  %v1162 = vadd.f32 0.0, %v1161
  %1163 = vmatmul.f32.gmra.mxu0 %v851
  %v1164 = vpop.f32.mrf.mxu0
  %v1165 = vadd.f32 0.0, %v1164
  %1166 = vmatmul.f32.gmra.mxu0 %v852
  %v1167 = vpop.f32.mrf.mxu0
  %v1168 = vadd.f32 0.0, %v1167
  %1169 = vmatmul.f32.gmra.mxu0 %v853
  %v1170 = vpop.f32.mrf.mxu0
  %v1171 = vadd.f32 0.0, %v1170
  %1172 = vmatmul.f32.gmra.mxu0 %v854
  %v1173 = vpop.f32.mrf.mxu0
  %v1174 = vadd.f32 0.0, %v1173
  %1175 = vmatmul.f32.gmra.mxu0 %v855
  %v1176 = vpop.f32.mrf.mxu0
  %v1177 = vadd.f32 0.0, %v1176
  %1178 = vmatmul.f32.gmra.mxu0 %v856
  %v1179 = vpop.f32.mrf.mxu0
  %v1180 = vadd.f32 0.0, %v1179
  %1181 = vdwg.mxu0
  %v1182 = vrot.slane %v1135, 1
  %v1183 = vrot.slane %v1138, 1
  %v1184 = vrot.slane %v1141, 1
  %v1185 = vrot.slane %v1144, 1
  %v1186 = vrot.slane %v1147, 1
  %v1187 = vrot.slane %v1150, 1
  %v1188 = vrot.slane %v1153, 1
  %v1189 = vrot.slane %v1156, 1
  %v1190 = vrot.slane %v1159, 1
  %v1191 = vrot.slane %v1162, 1
  %v1192 = vrot.slane %v1165, 1
  %v1193 = vrot.slane %v1168, 1
  %v1194 = vrot.slane %v1171, 1
  %v1195 = vrot.slane %v1174, 1
  %v1196 = vrot.slane %v1177, 1
  %v1197 = vrot.slane %v1180, 1
  %v1198 = vsel %vm732, %v1196, %v1197
  %v1199 = vsel %vm732, %v1195, %v1196
  %v1200 = vsel %vm732, %v1194, %v1195
  %v1201 = vsel %vm732, %v1193, %v1194
  %v1202 = vsel %vm732, %v1192, %v1193
  %v1203 = vsel %vm732, %v1191, %v1192
  %v1204 = vsel %vm732, %v1190, %v1191
  %v1205 = vsel %vm732, %v1189, %v1190
  %v1206 = vsel %vm732, %v1188, %v1189
  %v1207 = vsel %vm732, %v1187, %v1188
  %v1208 = vsel %vm732, %v1186, %v1187
  %v1209 = vsel %vm732, %v1185, %v1186
  %v1210 = vsel %vm732, %v1184, %v1185
  %v1211 = vsel %vm732, %v1183, %v1184
  %v1212 = vsel %vm732, %v1182, %v1183
  %v1213 = vsel %vm732, %v1197, %v1182
  %v1214 = vmul.f32 %v1212, %v375
  %v1215 = vmul.f32 %v1211, %v376
  %v1216 = vmul.f32 %v1210, %v377
  %v1217 = vmul.f32 %v1209, %v378
  %v1218 = vmul.f32 %v1208, %v379
  %v1219 = vmul.f32 %v1207, %v380
  %v1220 = vmul.f32 %v1206, %v381
  %v1221 = vmul.f32 %v1205, %v382
  %v1222 = vmul.f32 %v1204, %v383
  %v1223 = vmul.f32 %v1203, %v384
  %v1224 = vmul.f32 %v1202, %v385
  %v1225 = vmul.f32 %v1201, %v386
  %v1226 = vmul.f32 %v1200, %v387
  %v1227 = vmul.f32 %v1199, %v388
  %v1228 = vmul.f32 %v1198, %v389
  %v1229 = vmul.f32 %v1213, %v390
  %v1230 = vadd.f32 %v1084, %v1214
  %v1231 = vadd.f32 %v1085, %v1215
  %v1232 = vadd.f32 %v1086, %v1216
  %v1233 = vadd.f32 %v1087, %v1217
  %v1234 = vadd.f32 %v1088, %v1218
  %v1235 = vadd.f32 %v1089, %v1219
  %v1236 = vadd.f32 %v1090, %v1220
  %v1237 = vadd.f32 %v1091, %v1221
  %v1238 = vadd.f32 %v1092, %v1222
  %v1239 = vadd.f32 %v1093, %v1223
  %v1240 = vadd.f32 %v1094, %v1224
  %v1241 = vadd.f32 %v1095, %v1225
  %v1242 = vadd.f32 %v1096, %v1226
  %v1243 = vadd.f32 %v1097, %v1227
  %v1244 = vadd.f32 %v1098, %v1228
  %v1245 = vadd.f32 %v1099, %v1229
  %v1246 = vld [vmem:[%s6] sm:$0x1]
  %v1248 = vperm.slane %v1246, 0
  %v1250 = vadd.f32 %v1230, %v1248
  %v1251 = vadd.f32 %v1231, %v1248
  %v1252 = vadd.f32 %v1232, %v1248
  %v1253 = vadd.f32 %v1233, %v1248
  %v1254 = vadd.f32 %v1234, %v1248
  %v1255 = vadd.f32 %v1235, %v1248
  %v1256 = vadd.f32 %v1236, %v1248
  %v1257 = vadd.f32 %v1237, %v1248
  %v1258 = vadd.f32 %v1238, %v1248
  %v1259 = vadd.f32 %v1239, %v1248
  %v1260 = vadd.f32 %v1240, %v1248
  %v1261 = vadd.f32 %v1241, %v1248
  %v1262 = vadd.f32 %v1242, %v1248
  %v1263 = vadd.f32 %v1243, %v1248
  %v1264 = vadd.f32 %v1244, %v1248
  %v1265 = vadd.f32 %v1245, %v1248
  %v1266 = vld [vmem:[%s7] sm:$0x1]
  %v1268 = vperm.slane %v1266, 0
  %v1270 = vmul.f32 %v1250, %v1268
  %v1271 = vmul.f32 %v1251, %v1268
  %v1272 = vmul.f32 %v1252, %v1268
  %v1273 = vmul.f32 %v1253, %v1268
  %v1274 = vmul.f32 %v1254, %v1268
  %v1275 = vmul.f32 %v1255, %v1268
  %v1276 = vmul.f32 %v1256, %v1268
  %v1277 = vmul.f32 %v1257, %v1268
  %v1278 = vmul.f32 %v1258, %v1268
  %v1279 = vmul.f32 %v1259, %v1268
  %v1280 = vmul.f32 %v1260, %v1268
  %v1281 = vmul.f32 %v1261, %v1268
  %v1282 = vmul.f32 %v1262, %v1268
  %v1283 = vmul.f32 %v1263, %v1268
  %v1284 = vmul.f32 %v1264, %v1268
  %v1285 = vmul.f32 %v1265, %v1268
  %v1286 = vld [vmem:[%s8] sm:$0x1]
  %v1288 = vperm.slane %v1286, 0
  %v1290 = vadd.f32 %v1270, %v1288
  %v1291 = vadd.f32 %v1271, %v1288
  %v1292 = vadd.f32 %v1272, %v1288
  %v1293 = vadd.f32 %v1273, %v1288
  %v1294 = vadd.f32 %v1274, %v1288
  %v1295 = vadd.f32 %v1275, %v1288
  %v1296 = vadd.f32 %v1276, %v1288
  %v1297 = vadd.f32 %v1277, %v1288
  %v1298 = vadd.f32 %v1278, %v1288
  %v1299 = vadd.f32 %v1279, %v1288
  %v1300 = vadd.f32 %v1280, %v1288
  %v1301 = vadd.f32 %v1281, %v1288
  %v1302 = vadd.f32 %v1282, %v1288
  %v1303 = vadd.f32 %v1283, %v1288
  %v1304 = vadd.f32 %v1284, %v1288
  %v1305 = vadd.f32 %v1285, %v1288
  %v1306 = vadd.f32 %v1290, %v1291
  %v1307 = vadd.f32 %v1306, %v1292
  %v1308 = vadd.f32 %v1307, %v1293
  %v1309 = vadd.f32 %v1308, %v1294
  %v1310 = vadd.f32 %v1309, %v1295
  %v1311 = vadd.f32 %v1310, %v1296
  %v1312 = vadd.f32 %v1311, %v1297
  %v1313 = vrot.slane %v1312, 4
  %v1314 = vadd.f32 %v1312, %v1313
  %v1315 = vrot.slane %v1314, 2
  %v1316 = vadd.f32 %v1314, %v1315
  %v1317 = vrot.slane %v1316, 1
  %v1318 = vadd.f32 %v1316, %v1317
  %v1319 = vrcp.pop 64.0
  %v1320 = vmul.f32 64.0, %v1319
  %v1321 = vsub.f32 1.0, %v1320
  %v1322 = vmul.f32 %v1319, %v1321
  %v1323 = vadd.f32 %v1319, %v1322
  %vm1324 = vweird.f32 %v1319
  %v1325 = vsel %vm1324, %v1319, %v1323
  %v1326 = vmul.f32 %v1318, %v1325
  %v1327 = vmax.f32 %v1290, %v1294
  %v1328 = vmax.f32 %v1291, %v1295
  %v1329 = vmax.f32 %v1292, %v1296
  %v1330 = vmax.f32 %v1293, %v1297
  %v1331 = vmax.f32 %v1327, %v1328
  %v1332 = vmax.f32 %v1329, %v1330
  %v1333 = vmax.f32 %v1331, %v1332
  %v1334 = vrot.slane %v1333, 4
  %v1335 = vmax.f32 %v1333, %v1334
  %v1336 = vrot.slane %v1335, 2
  %v1337 = vmax.f32 %v1335, %v1336
  %v1338 = vrot.slane %v1337, 1
  %v1339 = vmax.f32 %v1337, %v1338
  %v1340 = vadd.f32 %v1298, %v1299
  %v1341 = vadd.f32 %v1340, %v1300
  %v1342 = vadd.f32 %v1341, %v1301
  %v1343 = vadd.f32 %v1342, %v1302
  %v1344 = vadd.f32 %v1343, %v1303
  %v1345 = vadd.f32 %v1344, %v1304
  %v1346 = vadd.f32 %v1345, %v1305
  %v1347 = vrot.slane %v1346, 4
  %v1348 = vadd.f32 %v1346, %v1347
  %v1349 = vrot.slane %v1348, 2
  %v1350 = vadd.f32 %v1348, %v1349
  %v1351 = vrot.slane %v1350, 1
  %v1352 = vadd.f32 %v1350, %v1351
  %v1353 = vmul.f32 %v1352, %v1325
  %v1354 = vmax.f32 %v1298, %v1302
  %v1355 = vmax.f32 %v1299, %v1303
  %v1356 = vmax.f32 %v1300, %v1304
  %v1357 = vmax.f32 %v1301, %v1305
  %v1358 = vmax.f32 %v1354, %v1355
  %v1359 = vmax.f32 %v1356, %v1357
  %v1360 = vmax.f32 %v1358, %v1359
  %v1361 = vrot.slane %v1360, 4
  %v1362 = vmax.f32 %v1360, %v1361
  %v1363 = vrot.slane %v1362, 2
  %v1364 = vmax.f32 %v1362, %v1363
  %v1365 = vrot.slane %v1364, 1
  %v1366 = vmax.f32 %v1364, %v1365
  %vm1367 = vcmask 1040384
  %v1368 = vsel %vm1367, %v1326, %v1353
  %vm1369 = vcmask 1041408
  %v1370 = vsel %vm1369, %v1368, %v1339
  %vm1371 = vcmask 1042432
  %v1372 = vsel %vm1371, %v1370, %v1366
  %v1373 = vld [vmem:[%s9] sm:$0xff]
  %v1374 = vld [vmem:[%s9 + $0x8] sm:$0xff]
  %v1375 = vld [vmem:[%s9 + $0x10] sm:$0xff]
  %v1376 = vld [vmem:[%s9 + $0x18] sm:$0xff]
  %v1377 = vld [vmem:[%s9 + $0x20] sm:$0xff]
  %v1378 = vld [vmem:[%s9 + $0x28] sm:$0xff]
  %v1379 = vld [vmem:[%s9 + $0x30] sm:$0xff]
  %v1380 = vld [vmem:[%s9 + $0x38] sm:$0xff]
  %v1381 = vld [vmem:[%s9 + $0x40] sm:$0xff]
  %v1382 = vld [vmem:[%s9 + $0x48] sm:$0xff]
  %v1383 = vld [vmem:[%s9 + $0x50] sm:$0xff]
  %v1384 = vld [vmem:[%s9 + $0x58] sm:$0xff]
  %v1385 = vld [vmem:[%s9 + $0x60] sm:$0xff]
  %v1386 = vld [vmem:[%s9 + $0x68] sm:$0xff]
  %v1387 = vld [vmem:[%s9 + $0x70] sm:$0xff]
  %v1388 = vld [vmem:[%s9 + $0x78] sm:$0xff]
  %1389 = vmatpush.msra.mxu0 %v1388
  %1390 = vmatpush.msra.mxu0 %v1387
  %1391 = vmatpush.msra.mxu0 %v1386
  %1392 = vmatpush.msra.mxu0 %v1385
  %1393 = vmatpush.msra.mxu0 %v1384
  %1394 = vmatpush.msra.mxu0 %v1383
  %1395 = vmatpush.msra.mxu0 %v1382
  %1396 = vmatpush.msra.mxu0 %v1381
  %1397 = vmatpush.msra.mxu0 %v1380
  %1398 = vmatpush.msra.mxu0 %v1379
  %1399 = vmatpush.msra.mxu0 %v1378
  %1400 = vmatpush.msra.mxu0 %v1377
  %1401 = vmatpush.msra.mxu0 %v1376
  %1402 = vmatpush.msra.mxu0 %v1375
  %1403 = vmatpush.msra.mxu0 %v1374
  %1404 = vmatpush.msra.mxu0 %v1373
  %1405 = vmatmul.f32.gmra.mxu0 %v1372
  %v1406 = vpop.f32.mrf.mxu0
  %v1407 = vadd.f32 0.0, %v1406
  %1408 = vdwg.mxu0
  %v1409 = vmax.f32 %v1407, 0.0
  %v1410 = vld [vmem:[%s10] sm:$0xff]
  %v1411 = vld [vmem:[%s10 + $0x8] sm:$0xff]
  %v1412 = vld [vmem:[%s10 + $0x10] sm:$0xff]
  %v1413 = vld [vmem:[%s10 + $0x18] sm:$0xff]
  %v1414 = vld [vmem:[%s10 + $0x20] sm:$0xff]
  %v1415 = vld [vmem:[%s10 + $0x28] sm:$0xff]
  %v1416 = vld [vmem:[%s10 + $0x30] sm:$0xff]
  %v1417 = vld [vmem:[%s10 + $0x38] sm:$0xff]
  %v1418 = vld [vmem:[%s10 + $0x40] sm:$0xff]
  %v1419 = vld [vmem:[%s10 + $0x48] sm:$0xff]
  %v1420 = vld [vmem:[%s10 + $0x50] sm:$0xff]
  %v1421 = vld [vmem:[%s10 + $0x58] sm:$0xff]
  %v1422 = vld [vmem:[%s10 + $0x60] sm:$0xff]
  %v1423 = vld [vmem:[%s10 + $0x68] sm:$0xff]
  %v1424 = vld [vmem:[%s10 + $0x70] sm:$0xff]
  %v1425 = vld [vmem:[%s10 + $0x78] sm:$0xff]
  %1426 = vmatpush.msra.mxu0 %v1425
  %1427 = vmatpush.msra.mxu0 %v1424
  %1428 = vmatpush.msra.mxu0 %v1423
  %1429 = vmatpush.msra.mxu0 %v1422
  %1430 = vmatpush.msra.mxu0 %v1421
  %1431 = vmatpush.msra.mxu0 %v1420
  %1432 = vmatpush.msra.mxu0 %v1419
  %1433 = vmatpush.msra.mxu0 %v1418
  %1434 = vmatpush.msra.mxu0 %v1417
  %1435 = vmatpush.msra.mxu0 %v1416
  %1436 = vmatpush.msra.mxu0 %v1415
  %1437 = vmatpush.msra.mxu0 %v1414
  %1438 = vmatpush.msra.mxu0 %v1413
  %1439 = vmatpush.msra.mxu0 %v1412
  %1440 = vmatpush.msra.mxu0 %v1411
  %1441 = vmatpush.msra.mxu0 %v1410
  %1442 = vmatmul.f32.gmra.mxu0 %v1409
  %v1443 = vpop.f32.mrf.mxu0
  %v1444 = vadd.f32 0.0, %v1443
  %1445 = vdwg.mxu0
  %v1447 = vrot.slane %v1444, 2
  %v1449 = vadd.f32 %v1444, %v1447
  %v1450 = vsub.f32 0.0, %v1449
  %v1451 = vmul.f32 %v1450, 1.442695
  %v1452 = vpow.pop %v1451
  %v1453 = vadd.f32 %v1452, 1.0
  %v1454 = vrcp.pop %v1453
  %v1455 = vmul.f32 %v1453, %v1454
  %v1456 = vsub.f32 1.0, %v1455
  %v1457 = vmul.f32 %v1454, %v1456
  %v1458 = vadd.f32 %v1454, %v1457
  %vm1459 = vweird.f32 %v1453
  %vm1460 = vweird.f32 %v1454
  %vm1461 = vmor %vm1459, %vm1460
  %v1462 = vsel %vm1461, %v1454, %v1458
  %v1463 = vand.u32 2147483647, %v1453
  %vm1464 = vcmp.eq.f32.partialorder %v1463, 8.507059e+37
  %v1465 = vand.u32 %v1453, 2147483648
  %v1466 = vor.u32 1.1754944e-38, %v1465
  %v1467 = vsel %vm1464, %v1466, %v1462
  %v1468 = vperm.slane %v1467, 0
  %v1469 = vmul.f32 %v1290, %v1468
  %v1470 = vmul.f32 %v1291, %v1468
  %v1471 = vmul.f32 %v1292, %v1468
  %v1472 = vmul.f32 %v1293, %v1468
  %v1473 = vmul.f32 %v1294, %v1468
  %v1474 = vmul.f32 %v1295, %v1468
  %v1475 = vmul.f32 %v1296, %v1468
  %v1476 = vmul.f32 %v1297, %v1468
  %v1477 = vadd.f32 %v1469, %v38
  %v1478 = vadd.f32 %v1470, %v39
  %v1479 = vadd.f32 %v1471, %v40
  %v1480 = vadd.f32 %v1472, %v41
  %v1481 = vadd.f32 %v1473, %v42
  %v1482 = vadd.f32 %v1474, %v43
  %v1483 = vadd.f32 %v1475, %v44
  %v1484 = vadd.f32 %v1476, %v45
  %v1485 = vmax.f32 %v1477, 0.0
  %v1486 = vmax.f32 %v1478, 0.0
  %v1487 = vmax.f32 %v1479, 0.0
  %v1488 = vmax.f32 %v1480, 0.0
  %v1489 = vmax.f32 %v1481, 0.0
  %v1490 = vmax.f32 %v1482, 0.0
  %v1491 = vmax.f32 %v1483, 0.0
  %v1492 = vmax.f32 %v1484, 0.0
  %v1493 = vperm.slane %v1467, 1
  %v1494 = vmul.f32 %v1298, %v1493
  %v1495 = vmul.f32 %v1299, %v1493
  %v1496 = vmul.f32 %v1300, %v1493
  %v1497 = vmul.f32 %v1301, %v1493
  %v1498 = vmul.f32 %v1302, %v1493
  %v1499 = vmul.f32 %v1303, %v1493
  %v1500 = vmul.f32 %v1304, %v1493
  %v1501 = vmul.f32 %v1305, %v1493
  %v1502 = vadd.f32 %v1494, %v46
  %v1503 = vadd.f32 %v1495, %v47
  %v1504 = vadd.f32 %v1496, %v48
  %v1505 = vadd.f32 %v1497, %v49
  %v1506 = vadd.f32 %v1498, %v50
  %v1507 = vadd.f32 %v1499, %v51
  %v1508 = vadd.f32 %v1500, %v52
  %v1509 = vadd.f32 %v1501, %v53
  %v1510 = vmax.f32 %v1502, 0.0
  %v1511 = vmax.f32 %v1503, 0.0
  %v1512 = vmax.f32 %v1504, 0.0
  %v1513 = vmax.f32 %v1505, 0.0
  %v1514 = vmax.f32 %v1506, 0.0
  %v1515 = vmax.f32 %v1507, 0.0
  %v1516 = vmax.f32 %v1508, 0.0
  %v1517 = vmax.f32 %v1509, 0.0
  %1518 = vst [vmem:[%s11] sm:$0xff] %v1485
  %1519 = vst [vmem:[%s11 + $0x8] sm:$0xff] %v1486
  %1520 = vst [vmem:[%s11 + $0x10] sm:$0xff] %v1487
  %1521 = vst [vmem:[%s11 + $0x18] sm:$0xff] %v1488
  %1522 = vst [vmem:[%s11 + $0x20] sm:$0xff] %v1489
  %1523 = vst [vmem:[%s11 + $0x28] sm:$0xff] %v1490
  %1524 = vst [vmem:[%s11 + $0x30] sm:$0xff] %v1491
  %1525 = vst [vmem:[%s11 + $0x38] sm:$0xff] %v1492
  %1526 = vst [vmem:[%s11 + $0x40] sm:$0xff] %v1510
  %1527 = vst [vmem:[%s11 + $0x48] sm:$0xff] %v1511
  %1528 = vst [vmem:[%s11 + $0x50] sm:$0xff] %v1512
  %1529 = vst [vmem:[%s11 + $0x58] sm:$0xff] %v1513
  %1530 = vst [vmem:[%s11 + $0x60] sm:$0xff] %v1514
  %1531 = vst [vmem:[%s11 + $0x68] sm:$0xff] %v1515
  %1532 = vst [vmem:[%s11 + $0x70] sm:$0xff] %v1516
  %1533 = vst [vmem:[%s11 + $0x78] sm:$0xff] %v1517
  // Predicated region
  $region46: #{rescbam_pallas.1} parent=0 // pred_check
    _
  $region47: #{rescbam_pallas.1} parent=0 // pred_check_branch
    %1535 = sbr.rel (0) target = $region49
  $region48: #{rescbam_pallas.1} parent=0 // pred_region
    _
  $region49: #{rescbam_pallas.1} parent=0 // pred_fallthru
    _
  // Predicated region
  $region50: #{rescbam_pallas.1} parent=0 // pred_check
    _
  $region51: #{rescbam_pallas.1} parent=0 // pred_check_branch
    %1537 = sbr.rel (0) target = $region53
  $region52: #{rescbam_pallas.1} parent=0 // pred_region
    _
  $region53: #{rescbam_pallas.1} parent=0 // pred_fallthru
    _

</llo_original>
